<compile_context>
chip_gen: v5e
topology: v5e:2x2
jax: 0.10.0
libtpu: 0.0.40
codegen_flags: <defaults>
</compile_context>

<pallas_src>
import functools
import math

import jax
import jax.numpy as jnp
from jax.experimental import pallas as pl
from jax.experimental.pallas import tpu as pltpu


_VMEM_LIMIT = 48 * 1024 * 1024  # safe on v7x (64 MiB/TC), ample on v5e/v6e


def _detect_bf16_exp():
    # bf16 EUP path exists on v6e / v7x; keep f32 exp elsewhere (v5e etc.).
    try:
        kind = jax.devices()[0].device_kind.lower()
        return ("v6" in kind) or ("v7" in kind)
    except Exception:
        return False


_EXP_BF16 = _detect_bf16_exp()


def _pick_tile(dim, target, align):
    """Largest tile <= target that is a multiple of `align` and divides `dim`.

    Falls back to the full dimension (single block) when no such tile exists,
    which keeps the (8,128)/full-dim BlockSpec rule satisfied at small shapes.
    """
    if dim <= target:
        return dim
    t = (target // align) * align
    while t >= align:
        if dim % t == 0:
            return t
        t -= align
    return dim


def _gelu(x):
    # TODO(synk): HF DistilBERT uses exact erf-based GELU; tanh approximation
    # is used here because erf lowering on the VPU/EUP is not guaranteed.
    c = jnp.float32(0.7978845608028654)  # sqrt(2/pi)
    return 0.5 * x * (1.0 + jnp.tanh(c * (x + 0.044715 * x * x * x)))


# --------------------------------------------------------------------------
# Linear: x @ W + b  (+ optional GELU, + optional fused residual + LayerNorm)
# Weight is a single VMEM-resident block; grid only tiles the M dimension.
# --------------------------------------------------------------------------

def _linear_kernel(*refs, activation, fuse_ln, eps):
    if fuse_ln:
        x_ref, w_ref, b_ref, r_ref, g_ref, bln_ref, o_ref = refs
    else:
        x_ref, w_ref, b_ref, o_ref = refs

    acc = jnp.dot(x_ref[...], w_ref[...], preferred_element_type=jnp.float32)
    acc = acc + b_ref[...]
    if activation == "gelu":
        acc = _gelu(acc)
    if fuse_ln:
        acc = acc + r_ref[...].astype(jnp.float32)
        mu = jnp.mean(acc, axis=-1, keepdims=True)
        var = jnp.mean(jnp.square(acc - mu), axis=-1, keepdims=True)
        acc = (acc - mu) * jax.lax.rsqrt(var + eps) * g_ref[...] + bln_ref[...]
    o_ref[...] = acc.astype(o_ref.dtype)


def linear(x, w, b, *, activation=None, residual=None, ln_g=None, ln_b=None,
           out_dtype=None, eps=1e-12, tm=512):
    m, k = x.shape
    k2, n = w.shape
    assert k == k2
    out_dtype = out_dtype or x.dtype
    tm = _pick_tile(m, tm, 16)      # bf16 sublane packing -> 16-row alignment
    fuse_ln = residual is not None

    x_spec = pl.BlockSpec((tm, k), lambda i: (i, 0))
    w_spec = pl.BlockSpec((k, n), lambda i: (0, 0))     # fully resident weight
    vec_spec = pl.BlockSpec((1, n), lambda i: (0, 0))
    row_out_spec = pl.BlockSpec((tm, n), lambda i: (i, 0))

    inputs = [x, w, b]
    in_specs = [x_spec, w_spec, vec_spec]
    if fuse_ln:
        inputs += [residual, ln_g, ln_b]
        in_specs += [pl.BlockSpec((tm, n), lambda i: (i, 0)),
                     pl.BlockSpec((1, n), lambda i: (0, 0)),
                     pl.BlockSpec((1, n), lambda i: (0, 0))]

    return pl.pallas_call(
        functools.partial(_linear_kernel, activation=activation,
                          fuse_ln=fuse_ln, eps=eps),
        grid=(m // tm,),
        in_specs=in_specs,
        out_specs=row_out_spec,
        out_shape=jax.ShapeDtypeStruct((m, n), out_dtype),
        compiler_params=pltpu.CompilerParams(
            dimension_semantics=("parallel",),
            vmem_limit_bytes=_VMEM_LIMIT),
    )(*inputs)


# --------------------------------------------------------------------------
# LayerNorm (embeddings only; per-layer LayerNorms are fused into linear())
# --------------------------------------------------------------------------

def _layernorm_kernel(x_ref, g_ref, b_ref, o_ref, *, eps):
    x = x_ref[...].astype(jnp.float32)
    mu = jnp.mean(x, axis=-1, keepdims=True)
    var = jnp.mean(jnp.square(x - mu), axis=-1, keepdims=True)
    o_ref[...] = ((x - mu) * jax.lax.rsqrt(var + eps) * g_ref[...]
                  + b_ref[...]).astype(o_ref.dtype)


def layernorm(x, g, b, eps=1e-12, tile_rows=1024):
    m, h = x.shape
    tr = _pick_tile(m, tile_rows, 16)
    row_spec = pl.BlockSpec((tr, h), lambda i: (i, 0))
    vec_spec = pl.BlockSpec((1, h), lambda i: (0, 0))
    return pl.pallas_call(
        functools.partial(_layernorm_kernel, eps=eps),
        grid=(m // tr,),
        in_specs=[row_spec, vec_spec, vec_spec],
        out_specs=row_spec,
        out_shape=jax.ShapeDtypeStruct((m, h), x.dtype),
        compiler_params=pltpu.CompilerParams(
            dimension_semantics=("parallel",),
            vmem_limit_bytes=_VMEM_LIMIT),
    )(x, g, b)


# --------------------------------------------------------------------------
# Multi-head attention: one batch element per grid step (all heads).
# Input is the packed QKV projection [B, S, 3H] with columns [Q | K | V];
# output is written directly in [B, S, H] layout.
# --------------------------------------------------------------------------

def _head_store_chunk(n_heads, d_head):
    # Smallest head group whose context width is a 128-lane multiple
    # (-> unmasked stores); fall back to all heads (full-dim store).
    for c in range(1, n_heads + 1):
        if n_heads % c == 0 and (c * d_head) % 128 == 0:
            return c
    return n_heads


def _attention_kernel(qkv_ref, bias_ref, o_ref, *, d_head, n_heads, chunk,
                      exp_bf16):
    bias = bias_ref[0]                       # (1, S) f32 additive mask
    h = n_heads * d_head
    for c0 in range(0, n_heads, chunk):
        ctxs = []
        for hh in range(c0, c0 + chunk):
            # Slice Q/K/V for this head straight from the ref (no slab load).
            q = qkv_ref[0, :, hh * d_head:(hh + 1) * d_head]
            k = qkv_ref[0, :, h + hh * d_head:h + (hh + 1) * d_head]
            v = qkv_ref[0, :, 2 * h + hh * d_head:2 * h + (hh + 1) * d_head]
            # Q is pre-scaled by 1/sqrt(d) in the weights; contract last dims
            # directly -> no materialized K transpose.
            s = jax.lax.dot_general(q, k, (((1,), (1,)), ((), ())),
                                    preferred_element_type=jnp.float32)
            s = s + bias
            s = s - jnp.max(s, axis=-1, keepdims=True)
            if exp_bf16:
                p = jnp.exp(s.astype(jnp.bfloat16))          # bf16 EUP path
                denom = jnp.sum(p.astype(jnp.float32), axis=-1, keepdims=True)
            else:
                p = jnp.exp(s)
                denom = jnp.sum(p, axis=-1, keepdims=True)
            ctx = jnp.dot(p.astype(v.dtype), v,
                          preferred_element_type=jnp.float32)
            # Normalize after the PV matmul: S*D multiplies instead of S^2.
            ctx = ctx * pl.reciprocal(denom, approx=True)
            ctxs.append(ctx)
        block = ctxs[0] if chunk == 1 else jnp.concatenate(ctxs, axis=-1)
        o_ref[0, :, c0 * d_head:(c0 + chunk) * d_head] = block.astype(o_ref.dtype)


def attention(qkv, mask_bias, *, n_heads, d_head):
    b, s, three_h = qkv.shape
    h = n_heads * d_head
    chunk = _head_store_chunk(n_heads, d_head)
    return pl.pallas_call(
        functools.partial(_attention_kernel, d_head=d_head, n_heads=n_heads,
                          chunk=chunk, exp_bf16=_EXP_BF16),
        grid=(b,),
        in_specs=[
            pl.BlockSpec((1, s, three_h), lambda bi: (bi, 0, 0)),
            pl.BlockSpec((1, 1, s), lambda bi: (bi, 0, 0)),
        ],
        out_specs=pl.BlockSpec((1, s, h), lambda bi: (bi, 0, 0)),
        out_shape=jax.ShapeDtypeStruct((b, s, h), qkv.dtype),
        compiler_params=pltpu.CompilerParams(
            dimension_semantics=("parallel",),
            vmem_limit_bytes=_VMEM_LIMIT),
    )(qkv, mask_bias)


# --------------------------------------------------------------------------
# Parameter init (deterministic, synthetic — no checkpoint loading)
# --------------------------------------------------------------------------

def _dense(key, fan_in, fan_out):
    kw, kb = jax.random.split(key)
    w = (0.02 * jax.random.normal(kw, (fan_in, fan_out), jnp.float32)
         ).astype(jnp.bfloat16)
    b = 0.02 * jax.random.normal(kb, (fan_out,), jnp.float32)
    return w, b


def init_params(key, *, vocab, max_pos, hidden, n_layers, ffn, num_classes):
    k_emb, k_pos, k_out, k_layers = jax.random.split(key, 4)
    params = {
        "word_emb": (0.02 * jax.random.normal(k_emb, (vocab, hidden),
                                              jnp.float32)).astype(jnp.bfloat16),
        "pos_emb": (0.02 * jax.random.normal(k_pos, (max_pos, hidden),
                                             jnp.float32)).astype(jnp.bfloat16),
        "emb_ln_g": jnp.ones((hidden,), jnp.float32),
        "emb_ln_b": jnp.zeros((hidden,), jnp.float32),
        "layers": [],
    }
    lkeys = jax.random.split(k_layers, n_layers)
    for lk in lkeys:
        ks = jax.random.split(lk, 6)
        wq, bq = _dense(ks[0], hidden, hidden)
        wk, bk = _dense(ks[1], hidden, hidden)
        wv, bv = _dense(ks[2], hidden, hidden)
        wo, bo = _dense(ks[3], hidden, hidden)
        w1, b1 = _dense(ks[4], hidden, ffn)
        w2, b2 = _dense(ks[5], ffn, hidden)
        params["layers"].append(dict(
            wq=wq, bq=bq, wk=wk, bk=bk, wv=wv, bv=bv, wo=wo, bo=bo,
            ln1_g=jnp.ones((hidden,), jnp.float32),
            ln1_b=jnp.zeros((hidden,), jnp.float32),
            w1=w1, b1=b1, w2=w2, b2=b2,
            ln2_g=jnp.ones((hidden,), jnp.float32),
            ln2_b=jnp.zeros((hidden,), jnp.float32),
        ))
    w_out, b_out = _dense(k_out, hidden, num_classes)
    params["out_w"] = w_out
    params["out_b"] = b_out
    return params


def prepare_params(params, *, n_heads):
    """One-time inference-time weight prep (hoisted out of the forward pass):
    fused/scaled [H, 3H] QKV weight, (1, N) f32 biases and LN params,
    128-padded classifier head."""
    h = params["word_emb"].shape[1]
    d_head = h // n_heads
    scale = 1.0 / math.sqrt(d_head)
    cdtype = jnp.bfloat16

    prep = {
        "word_emb": params["word_emb"].astype(cdtype),
        "pos_emb": params["pos_emb"].astype(cdtype),
        "emb_ln_g": params["emb_ln_g"].reshape(1, h).astype(jnp.float32),
        "emb_ln_b": params["emb_ln_b"].reshape(1, h).astype(jnp.float32),
        "layers": [],
    }
    for lp in params["layers"]:
        wq = lp["wq"].astype(jnp.float32) * scale     # fold 1/sqrt(d) into Q
        bq = lp["bq"].astype(jnp.float32) * scale
        ffn = lp["w1"].shape[1]
        w_qkv = jnp.concatenate([wq.astype(cdtype),
                                 lp["wk"].astype(cdtype),
                                 lp["wv"].astype(cdtype)], axis=1)
        b_qkv = jnp.concatenate([bq,
                                 lp["bk"].astype(jnp.float32),
                                 lp["bv"].astype(jnp.float32)]).reshape(1, 3 * h)
        prep["layers"].append(dict(
            w_qkv=w_qkv, b_qkv=b_qkv,
            wo=lp["wo"].astype(cdtype),
            bo=lp["bo"].reshape(1, h).astype(jnp.float32),
            ln1_g=lp["ln1_g"].reshape(1, h).astype(jnp.float32),
            ln1_b=lp["ln1_b"].reshape(1, h).astype(jnp.float32),
            w1=lp["w1"].astype(cdtype),
            b1=lp["b1"].reshape(1, ffn).astype(jnp.float32),
            w2=lp["w2"].astype(cdtype),
            b2=lp["b2"].reshape(1, h).astype(jnp.float32),
            ln2_g=lp["ln2_g"].reshape(1, h).astype(jnp.float32),
            ln2_b=lp["ln2_b"].reshape(1, h).astype(jnp.float32),
        ))

    num_classes = params["out_b"].shape[0]
    n_pad = ((num_classes + 127) // 128) * 128
    prep["out_w"] = jnp.zeros((h, n_pad), cdtype).at[:, :num_classes].set(
        params["out_w"].astype(cdtype))
    prep["out_b"] = jnp.zeros((1, n_pad), jnp.float32).at[0, :num_classes].set(
        params["out_b"].astype(jnp.float32))
    return prep


# --------------------------------------------------------------------------
# Forward pass (glue around the Pallas kernels)
# --------------------------------------------------------------------------

def distilbert_classifier_forward(prep, input_ids, attention_mask, *,
                                  n_heads, num_classes):
    b, s = input_ids.shape
    h = prep["word_emb"].shape[1]
    d_head = h // n_heads

    # Embeddings (gather is plain-JAX glue), LayerNorm in Pallas (f32 stats).
    x = (prep["word_emb"][input_ids]
         + prep["pos_emb"][jnp.arange(s)][None]).astype(jnp.bfloat16)
    x = layernorm(x.reshape(b * s, h), prep["emb_ln_g"], prep["emb_ln_b"])
    # embedding dropout: identity at inference

    # Additive attention bias, [B, 1, S], kept in f32 (-1e9 not bf16-safe).
    mask_bias = jnp.where(attention_mask[:, None, :] == 0,
                          jnp.float32(-1e9), jnp.float32(0.0))

    for lp in prep["layers"]:
        res = x                                                   # [B*S, H]
        qkv = linear(x, lp["w_qkv"], lp["b_qkv"])                 # [B*S, 3H]
        ctx = attention(qkv.reshape(b, s, 3 * h), mask_bias,
                        n_heads=n_heads, d_head=d_head)           # [B, S, H]
        # output projection + residual + LayerNorm fused into one kernel
        sa = linear(ctx.reshape(b * s, h), lp["wo"], lp["bo"],
                    residual=res, ln_g=lp["ln1_g"], ln_b=lp["ln1_b"])
        ff = linear(sa, lp["w1"], lp["b1"], activation="gelu")
        # FFN down-projection + residual + LayerNorm fused
        x = linear(ff, lp["w2"], lp["b2"],
                   residual=sa, ln_g=lp["ln2_g"], ln_b=lp["ln2_b"])

    hidden_states = x.reshape(b, s, h)     # DistilBert(...)[0]
    cls = hidden_states[:, 0]              # pooled_output[:, 0]
    # nn.Dropout(0.3): identity at inference

    # Classifier head on the pre-padded 128-wide weight; slice back.
    logits = linear(cls, prep["out_w"], prep["out_b"], out_dtype=jnp.float32)
    return logits[:, :num_classes]


# --------------------------------------------------------------------------

if __name__ == "__main__":
    # Small synthetic config consistent with the module's forward.
    BATCH, SEQ = 2, 8
    HIDDEN, N_HEADS, N_LAYERS, FFN = 64, 4, 2, 128
    VOCAB, MAX_POS, NUM_CLASSES = 100, 16, 3

    key = jax.random.PRNGKey(0)
    k_params, k_ids = jax.random.split(key)

    params = init_params(k_params, vocab=VOCAB, max_pos=MAX_POS, hidden=HIDDEN,
                         n_layers=N_LAYERS, ffn=FFN, num_classes=NUM_CLASSES)
    prep = prepare_params(params, n_heads=N_HEADS)     # one-time weight prep

    input_ids = jax.random.randint(k_ids, (BATCH, SEQ), 0, VOCAB, dtype=jnp.int32)
    # second example has its last two tokens padded to exercise the mask
    attention_mask = (jnp.arange(SEQ)[None, :]
                      < jnp.array([SEQ, SEQ - 2])[:, None]).astype(jnp.int32)

    fwd = jax.jit(functools.partial(distilbert_classifier_forward,
                                    n_heads=N_HEADS, num_classes=NUM_CLASSES))
    logits = fwd(prep, input_ids, attention_mask)
    jax.block_until_ready(logits)
    assert logits.shape == (BATCH, NUM_CLASSES)
    print("KERNEL_OK")
</pallas_src>

<mosaic_0001>
module attributes {stable_mosaic.version = 11 : i64} {
  func.func @_layernorm_kernel(%arg0: i32, %arg1: memref<16x64xbf16, #tpu.memory_space<vmem>>, %arg2: memref<1x64xf32, #tpu.memory_space<vmem>>, %arg3: memref<1x64xf32, #tpu.memory_space<vmem>>, %arg4: memref<16x64xbf16, #tpu.memory_space<vmem>>) attributes {dimension_semantics = [#tpu.dimension_semantics<parallel>], iteration_bounds = array<i64: 1>, scalar_prefetch = 0 : i64, scratch_operands = 0 : i64, tpu.core_type = #tpu.core_type<tc>, window_params = [{transform_indices = @transform_0, window_bounds = array<i64: 16, 64>}, {pipeline_mode = #tpu.pipeline_mode<synchronous>, transform_indices = @transform_1, window_bounds = array<i64: 1, 64>}, {pipeline_mode = #tpu.pipeline_mode<synchronous>, transform_indices = @transform_2, window_bounds = array<i64: 1, 64>}, {transform_indices = @transform_3, window_bounds = array<i64: 16, 64>}]} {
    %c0 = arith.constant 0 : index
    %c0_0 = arith.constant 0 : index
    %0 = vector.load %arg1[%c0, %c0_0] : memref<16x64xbf16, #tpu.memory_space<vmem>>, vector<16x64xbf16>
    %1 = arith.extf %0 : vector<16x64xbf16> to vector<16x64xf32>
    %cst = arith.constant dense<0.000000e+00> : vector<16xf32>
    %2 = vector.multi_reduction <add>, %1, %cst [1] : vector<16x64xf32> to vector<16xf32>
    %3 = vector.shape_cast %2 : vector<16xf32> to vector<16x1xf32>
    %cst_1 = arith.constant 6.400000e+01 : f32
    %4 = vector.broadcast %cst_1 : f32 to vector<16x1xf32>
    %5 = arith.divf %3, %4 : vector<16x1xf32>
    %6 = vector.broadcast %5 : vector<16x1xf32> to vector<16x64xf32>
    %7 = arith.subf %1, %6 : vector<16x64xf32>
    %8 = arith.mulf %7, %7 : vector<16x64xf32>
    %cst_2 = arith.constant dense<0.000000e+00> : vector<16xf32>
    %9 = vector.multi_reduction <add>, %8, %cst_2 [1] : vector<16x64xf32> to vector<16xf32>
    %10 = vector.shape_cast %9 : vector<16xf32> to vector<16x1xf32>
    %cst_3 = arith.constant 6.400000e+01 : f32
    %11 = vector.broadcast %cst_3 : f32 to vector<16x1xf32>
    %12 = arith.divf %10, %11 : vector<16x1xf32>
    %13 = vector.broadcast %5 : vector<16x1xf32> to vector<16x64xf32>
    %14 = arith.subf %1, %13 : vector<16x64xf32>
    %cst_4 = arith.constant 9.99999996E-13 : f32
    %15 = vector.broadcast %cst_4 : f32 to vector<16x1xf32>
    %16 = arith.addf %12, %15 : vector<16x1xf32>
    %17 = math.rsqrt %16 : vector<16x1xf32>
    %18 = vector.broadcast %17 : vector<16x1xf32> to vector<16x64xf32>
    %19 = arith.mulf %14, %18 : vector<16x64xf32>
    %c0_5 = arith.constant 0 : index
    %c0_6 = arith.constant 0 : index
    %20 = vector.load %arg2[%c0_5, %c0_6] : memref<1x64xf32, #tpu.memory_space<vmem>>, vector<1x64xf32>
    %21 = vector.broadcast %20 : vector<1x64xf32> to vector<16x64xf32>
    %22 = arith.mulf %19, %21 : vector<16x64xf32>
    %c0_7 = arith.constant 0 : index
    %c0_8 = arith.constant 0 : index
    %23 = vector.load %arg3[%c0_7, %c0_8] : memref<1x64xf32, #tpu.memory_space<vmem>>, vector<1x64xf32>
    %24 = vector.broadcast %23 : vector<1x64xf32> to vector<16x64xf32>
    %25 = arith.addf %22, %24 : vector<16x64xf32>
    %26 = arith.truncf %25 : vector<16x64xf32> to vector<16x64xbf16>
    %c0_9 = arith.constant 0 : index
    %c0_10 = arith.constant 0 : index
    %27 = vector.load %arg4[%c0_9, %c0_10] : memref<16x64xbf16, #tpu.memory_space<vmem>>, vector<16x64xbf16>
    tpu.vector_store %arg4[%c0_9, %c0_10], %26 {strides = array<i32>} : memref<16x64xbf16, #tpu.memory_space<vmem>>, vector<16x64xbf16>,
    return
  }
  func.func @transform_0(%arg0: i32) -> (i32, i32) {
    %c0_i32 = arith.constant 0 : i32
    %c0_i32_0 = arith.constant 0 : i32
    return %arg0, %c0_i32 : i32, i32
  }
  func.func @transform_1(%arg0: i32) -> (i32, i32) {
    %c0_i32 = arith.constant 0 : i32
    %c0_i32_0 = arith.constant 0 : i32
    %c0_i32_1 = arith.constant 0 : i32
    return %c0_i32, %c0_i32_0 : i32, i32
  }
  func.func @transform_2(%arg0: i32) -> (i32, i32) {
    %c0_i32 = arith.constant 0 : i32
    %c0_i32_0 = arith.constant 0 : i32
    %c0_i32_1 = arith.constant 0 : i32
    return %c0_i32, %c0_i32_0 : i32, i32
  }
  func.func @transform_3(%arg0: i32) -> (i32, i32) {
    %c0_i32 = arith.constant 0 : i32
    %c0_i32_0 = arith.constant 0 : i32
    return %arg0, %c0_i32 : i32, i32
  }
}

module attributes {stable_mosaic.version = 11 : i64} {
  func.func @_linear_kernel(%arg0: i32, %arg1: memref<16x64xbf16, #tpu.memory_space<vmem>>, %arg2: memref<64x64xbf16, #tpu.memory_space<vmem>>, %arg3: memref<1x64xf32, #tpu.memory_space<vmem>>, %arg4: memref<16x64xbf16, #tpu.memory_space<vmem>>, %arg5: memref<1x64xf32, #tpu.memory_space<vmem>>, %arg6: memref<1x64xf32, #tpu.memory_space<vmem>>, %arg7: memref<16x64xbf16, #tpu.memory_space<vmem>>) attributes {dimension_semantics = [#tpu.dimension_semantics<parallel>], iteration_bounds = array<i64: 1>, scalar_prefetch = 0 : i64, scratch_operands = 0 : i64, tpu.core_type = #tpu.core_type<tc>, window_params = [{transform_indices = @transform_0, window_bounds = array<i64: 16, 64>}, {pipeline_mode = #tpu.pipeline_mode<synchronous>, transform_indices = @transform_1, window_bounds = array<i64: 64, 64>}, {pipeline_mode = #tpu.pipeline_mode<synchronous>, transform_indices = @transform_2, window_bounds = array<i64: 1, 64>}, {transform_indices = @transform_3, window_bounds = array<i64: 16, 64>}, {pipeline_mode = #tpu.pipeline_mode<synchronous>, transform_indices = @transform_4, window_bounds = array<i64: 1, 64>}, {pipeline_mode = #tpu.pipeline_mode<synchronous>, transform_indices = @transform_5, window_bounds = array<i64: 1, 64>}, {transform_indices = @transform_6, window_bounds = array<i64: 16, 64>}]} {
    %c0 = arith.constant 0 : index
    %c0_0 = arith.constant 0 : index
    %0 = vector.load %arg1[%c0, %c0_0] : memref<16x64xbf16, #tpu.memory_space<vmem>>, vector<16x64xbf16>
    %c0_1 = arith.constant 0 : index
    %c0_2 = arith.constant 0 : index
    %1 = vector.load %arg2[%c0_1, %c0_2] : memref<64x64xbf16, #tpu.memory_space<vmem>>, vector<64x64xbf16>
    %cst = arith.constant dense<0.000000e+00> : vector<16x64xf32>
    %2 = tpu.matmul %0, %1, %cst {dimension_numbers = #tpu.dot_dimension_numbers<[1], [0], [0], [1], [0, 0, 1, 1], [], []>} : vector<16x64xbf16>, vector<64x64xbf16>, vector<16x64xf32> -> vector<16x64xf32>
    %c0_3 = arith.constant 0 : index
    %c0_4 = arith.constant 0 : index
    %3 = vector.load %arg3[%c0_3, %c0_4] : memref<1x64xf32, #tpu.memory_space<vmem>>, vector<1x64xf32>
    %4 = vector.broadcast %3 : vector<1x64xf32> to vector<16x64xf32>
    %5 = arith.addf %2, %4 : vector<16x64xf32>
    %c0_5 = arith.constant 0 : index
    %c0_6 = arith.constant 0 : index
    %6 = vector.load %arg4[%c0_5, %c0_6] : memref<16x64xbf16, #tpu.memory_space<vmem>>, vector<16x64xbf16>
    %7 = arith.extf %6 : vector<16x64xbf16> to vector<16x64xf32>
    %8 = arith.addf %5, %7 : vector<16x64xf32>
    %cst_7 = arith.constant dense<0.000000e+00> : vector<16xf32>
    %9 = vector.multi_reduction <add>, %8, %cst_7 [1] : vector<16x64xf32> to vector<16xf32>
    %10 = vector.shape_cast %9 : vector<16xf32> to vector<16x1xf32>
    %cst_8 = arith.constant 6.400000e+01 : f32
    %11 = vector.broadcast %cst_8 : f32 to vector<16x1xf32>
    %12 = arith.divf %10, %11 : vector<16x1xf32>
    %13 = vector.broadcast %12 : vector<16x1xf32> to vector<16x64xf32>
    %14 = arith.subf %8, %13 : vector<16x64xf32>
    %15 = arith.mulf %14, %14 : vector<16x64xf32>
    %cst_9 = arith.constant dense<0.000000e+00> : vector<16xf32>
    %16 = vector.multi_reduction <add>, %15, %cst_9 [1] : vector<16x64xf32> to vector<16xf32>
    %17 = vector.shape_cast %16 : vector<16xf32> to vector<16x1xf32>
    %cst_10 = arith.constant 6.400000e+01 : f32
    %18 = vector.broadcast %cst_10 : f32 to vector<16x1xf32>
    %19 = arith.divf %17, %18 : vector<16x1xf32>
    %20 = vector.broadcast %12 : vector<16x1xf32> to vector<16x64xf32>
    %21 = arith.subf %8, %20 : vector<16x64xf32>
    %cst_11 = arith.constant 9.99999996E-13 : f32
    %22 = vector.broadcast %cst_11 : f32 to vector<16x1xf32>
    %23 = arith.addf %19, %22 : vector<16x1xf32>
    %24 = math.rsqrt %23 : vector<16x1xf32>
    %25 = vector.broadcast %24 : vector<16x1xf32> to vector<16x64xf32>
    %26 = arith.mulf %21, %25 : vector<16x64xf32>
    %c0_12 = arith.constant 0 : index
    %c0_13 = arith.constant 0 : index
    %27 = vector.load %arg5[%c0_12, %c0_13] : memref<1x64xf32, #tpu.memory_space<vmem>>, vector<1x64xf32>
    %28 = vector.broadcast %27 : vector<1x64xf32> to vector<16x64xf32>
    %29 = arith.mulf %26, %28 : vector<16x64xf32>
    %c0_14 = arith.constant 0 : index
    %c0_15 = arith.constant 0 : index
    %30 = vector.load %arg6[%c0_14, %c0_15] : memref<1x64xf32, #tpu.memory_space<vmem>>, vector<1x64xf32>
    %31 = vector.broadcast %30 : vector<1x64xf32> to vector<16x64xf32>
    %32 = arith.addf %29, %31 : vector<16x64xf32>
    %33 = arith.truncf %32 : vector<16x64xf32> to vector<16x64xbf16>
    %c0_16 = arith.constant 0 : index
    %c0_17 = arith.constant 0 : index
    %34 = vector.load %arg7[%c0_16, %c0_17] : memref<16x64xbf16, #tpu.memory_space<vmem>>, vector<16x64xbf16>
    tpu.vector_store %arg7[%c0_16, %c0_17], %33 {strides = array<i32>} : memref<16x64xbf16, #tpu.memory_space<vmem>>, vector<16x64xbf16>,
    return
  }
  func.func @transform_0(%arg0: i32) -> (i32, i32) {
    %c0_i32 = arith.constant 0 : i32
    %c0_i32_0 = arith.constant 0 : i32
    return %arg0, %c0_i32 : i32, i32
  }
  func.func @transform_1(%arg0: i32) -> (i32, i32) {
    %c0_i32 = arith.constant 0 : i32
    %c0_i32_0 = arith.constant 0 : i32
    %c0_i32_1 = arith.constant 0 : i32
    return %c0_i32, %c0_i32_0 : i32, i32
  }
  func.func @transform_2(%arg0: i32) -> (i32, i32) {
    %c0_i32 = arith.constant 0 : i32
    %c0_i32_0 = arith.constant 0 : i32
    %c0_i32_1 = arith.constant 0 : i32
    return %c0_i32, %c0_i32_0 : i32, i32
  }
  func.func @transform_3(%arg0: i32) -> (i32, i32) {
    %c0_i32 = arith.constant 0 : i32
    %c0_i32_0 = arith.constant 0 : i32
    return %arg0, %c0_i32 : i32, i32
  }
  func.func @transform_4(%arg0: i32) -> (i32, i32) {
    %c0_i32 = arith.constant 0 : i32
    %c0_i32_0 = arith.constant 0 : i32
    %c0_i32_1 = arith.constant 0 : i32
    return %c0_i32, %c0_i32_0 : i32, i32
  }
  func.func @transform_5(%arg0: i32) -> (i32, i32) {
    %c0_i32 = arith.constant 0 : i32
    %c0_i32_0 = arith.constant 0 : i32
    %c0_i32_1 = arith.constant 0 : i32
    return %c0_i32, %c0_i32_0 : i32, i32
  }
  func.func @transform_6(%arg0: i32) -> (i32, i32) {
    %c0_i32 = arith.constant 0 : i32
    %c0_i32_0 = arith.constant 0 : i32
    return %arg0, %c0_i32 : i32, i32
  }
}

module attributes {stable_mosaic.version = 11 : i64} {
  func.func @_attention_kernel(%arg0: i32, %arg1: memref<1x8x192xbf16, #tpu.memory_space<vmem>>, %arg2: memref<1x1x8xf32, #tpu.memory_space<vmem>>, %arg3: memref<1x8x64xbf16, #tpu.memory_space<vmem>>) attributes {dimension_semantics = [#tpu.dimension_semantics<parallel>], iteration_bounds = array<i64: 2>, scalar_prefetch = 0 : i64, scratch_operands = 0 : i64, tpu.core_type = #tpu.core_type<tc>, window_params = [{transform_indices = @transform_0, window_bounds = array<i64: 1, 8, 192>}, {transform_indices = @transform_1, window_bounds = array<i64: 1, 1, 8>}, {transform_indices = @transform_2, window_bounds = array<i64: 1, 8, 64>}]} {
    %c0 = arith.constant 0 : index
    %c0_0 = arith.constant 0 : index
    %c0_1 = arith.constant 0 : index
    %0 = vector.load %arg2[%c0, %c0_0, %c0_1] : memref<1x1x8xf32, #tpu.memory_space<vmem>>, vector<1x1x8xf32>
    %1 = vector.shape_cast %0 : vector<1x1x8xf32> to vector<1x8xf32>
    %c0_2 = arith.constant 0 : index
    %c0_3 = arith.constant 0 : index
    %c0_4 = arith.constant 0 : index
    %2 = vector.load %arg1[%c0_2, %c0_3, %c0_4] : memref<1x8x192xbf16, #tpu.memory_space<vmem>>, vector<1x8x16xbf16>
    %3 = vector.shape_cast %2 : vector<1x8x16xbf16> to vector<8x16xbf16>
    %c0_5 = arith.constant 0 : index
    %c0_6 = arith.constant 0 : index
    %c64 = arith.constant 64 : index
    %4 = vector.load %arg1[%c0_5, %c0_6, %c64] : memref<1x8x192xbf16, #tpu.memory_space<vmem>>, vector<1x8x16xbf16>
    %5 = vector.shape_cast %4 : vector<1x8x16xbf16> to vector<8x16xbf16>
    %c0_7 = arith.constant 0 : index
    %c0_8 = arith.constant 0 : index
    %c128 = arith.constant 128 : index
    %6 = vector.load %arg1[%c0_7, %c0_8, %c128] : memref<1x8x192xbf16, #tpu.memory_space<vmem>>, vector<1x8x16xbf16>
    %7 = vector.shape_cast %6 : vector<1x8x16xbf16> to vector<8x16xbf16>
    %cst = arith.constant dense<0.000000e+00> : vector<8x8xf32>
    %8 = tpu.matmul %3, %5, %cst {dimension_numbers = #tpu.dot_dimension_numbers<[1], [1], [0], [0], [0, 0, 1, 0], [], []>} : vector<8x16xbf16>, vector<8x16xbf16>, vector<8x8xf32> -> vector<8x8xf32>
    %9 = vector.broadcast %1 : vector<1x8xf32> to vector<8x8xf32>
    %10 = arith.addf %8, %9 : vector<8x8xf32>
    %cst_9 = arith.constant dense<0xFF800000> : vector<8xf32>
    %11 = vector.multi_reduction <maximumf>, %10, %cst_9 [1] : vector<8x8xf32> to vector<8xf32>
    %12 = vector.shape_cast %11 : vector<8xf32> to vector<8x1xf32>
    %13 = vector.broadcast %12 : vector<8x1xf32> to vector<8x8xf32>
    %14 = arith.subf %10, %13 : vector<8x8xf32>
    %15 = math.exp %14 : vector<8x8xf32>
    %cst_10 = arith.constant dense<0.000000e+00> : vector<8xf32>
    %16 = vector.multi_reduction <add>, %15, %cst_10 [1] : vector<8x8xf32> to vector<8xf32>
    %17 = vector.shape_cast %16 : vector<8xf32> to vector<8x1xf32>
    %18 = arith.truncf %15 : vector<8x8xf32> to vector<8x8xbf16>
    %cst_11 = arith.constant dense<0.000000e+00> : vector<8x16xf32>
    %19 = tpu.matmul %18, %7, %cst_11 {dimension_numbers = #tpu.dot_dimension_numbers<[1], [0], [0], [1], [0, 0, 1, 1], [], []>} : vector<8x8xbf16>, vector<8x16xbf16>, vector<8x16xf32> -> vector<8x16xf32>
    %20 = tpu.reciprocal %17 {approx = true} : vector<8x1xf32> -> vector<8x1xf32>
    %21 = vector.broadcast %20 : vector<8x1xf32> to vector<8x16xf32>
    %22 = arith.mulf %19, %21 : vector<8x16xf32>
    %c0_12 = arith.constant 0 : index
    %c0_13 = arith.constant 0 : index
    %c16 = arith.constant 16 : index
    %23 = vector.load %arg1[%c0_12, %c0_13, %c16] : memref<1x8x192xbf16, #tpu.memory_space<vmem>>, vector<1x8x16xbf16>
    %24 = vector.shape_cast %23 : vector<1x8x16xbf16> to vector<8x16xbf16>
    %c0_14 = arith.constant 0 : index
    %c0_15 = arith.constant 0 : index
    %c80 = arith.constant 80 : index
    %25 = vector.load %arg1[%c0_14, %c0_15, %c80] : memref<1x8x192xbf16, #tpu.memory_space<vmem>>, vector<1x8x16xbf16>
    %26 = vector.shape_cast %25 : vector<1x8x16xbf16> to vector<8x16xbf16>
    %c0_16 = arith.constant 0 : index
    %c0_17 = arith.constant 0 : index
    %c144 = arith.constant 144 : index
    %27 = vector.load %arg1[%c0_16, %c0_17, %c144] : memref<1x8x192xbf16, #tpu.memory_space<vmem>>, vector<1x8x16xbf16>
    %28 = vector.shape_cast %27 : vector<1x8x16xbf16> to vector<8x16xbf16>
    %cst_18 = arith.constant dense<0.000000e+00> : vector<8x8xf32>
    %29 = tpu.matmul %24, %26, %cst_18 {dimension_numbers = #tpu.dot_dimension_numbers<[1], [1], [0], [0], [0, 0, 1, 0], [], []>} : vector<8x16xbf16>, vector<8x16xbf16>, vector<8x8xf32> -> vector<8x8xf32>
    %30 = vector.broadcast %1 : vector<1x8xf32> to vector<8x8xf32>
    %31 = arith.addf %29, %30 : vector<8x8xf32>
    %cst_19 = arith.constant dense<0xFF800000> : vector<8xf32>
    %32 = vector.multi_reduction <maximumf>, %31, %cst_19 [1] : vector<8x8xf32> to vector<8xf32>
    %33 = vector.shape_cast %32 : vector<8xf32> to vector<8x1xf32>
    %34 = vector.broadcast %33 : vector<8x1xf32> to vector<8x8xf32>
    %35 = arith.subf %31, %34 : vector<8x8xf32>
    %36 = math.exp %35 : vector<8x8xf32>
    %cst_20 = arith.constant dense<0.000000e+00> : vector<8xf32>
    %37 = vector.multi_reduction <add>, %36, %cst_20 [1] : vector<8x8xf32> to vector<8xf32>
    %38 = vector.shape_cast %37 : vector<8xf32> to vector<8x1xf32>
    %39 = arith.truncf %36 : vector<8x8xf32> to vector<8x8xbf16>
    %cst_21 = arith.constant dense<0.000000e+00> : vector<8x16xf32>
    %40 = tpu.matmul %39, %28, %cst_21 {dimension_numbers = #tpu.dot_dimension_numbers<[1], [0], [0], [1], [0, 0, 1, 1], [], []>} : vector<8x8xbf16>, vector<8x16xbf16>, vector<8x16xf32> -> vector<8x16xf32>
    %41 = tpu.reciprocal %38 {approx = true} : vector<8x1xf32> -> vector<8x1xf32>
    %42 = vector.broadcast %41 : vector<8x1xf32> to vector<8x16xf32>
    %43 = arith.mulf %40, %42 : vector<8x16xf32>
    %c0_22 = arith.constant 0 : index
    %c0_23 = arith.constant 0 : index
    %c32 = arith.constant 32 : index
    %44 = vector.load %arg1[%c0_22, %c0_23, %c32] : memref<1x8x192xbf16, #tpu.memory_space<vmem>>, vector<1x8x16xbf16>
    %45 = vector.shape_cast %44 : vector<1x8x16xbf16> to vector<8x16xbf16>
    %c0_24 = arith.constant 0 : index
    %c0_25 = arith.constant 0 : index
    %c96 = arith.constant 96 : index
    %46 = vector.load %arg1[%c0_24, %c0_25, %c96] : memref<1x8x192xbf16, #tpu.memory_space<vmem>>, vector<1x8x16xbf16>
    %47 = vector.shape_cast %46 : vector<1x8x16xbf16> to vector<8x16xbf16>
    %c0_26 = arith.constant 0 : index
    %c0_27 = arith.constant 0 : index
    %c160 = arith.constant 160 : index
    %48 = vector.load %arg1[%c0_26, %c0_27, %c160] : memref<1x8x192xbf16, #tpu.memory_space<vmem>>, vector<1x8x16xbf16>
    %49 = vector.shape_cast %48 : vector<1x8x16xbf16> to vector<8x16xbf16>
    %cst_28 = arith.constant dense<0.000000e+00> : vector<8x8xf32>
    %50 = tpu.matmul %45, %47, %cst_28 {dimension_numbers = #tpu.dot_dimension_numbers<[1], [1], [0], [0], [0, 0, 1, 0], [], []>} : vector<8x16xbf16>, vector<8x16xbf16>, vector<8x8xf32> -> vector<8x8xf32>
    %51 = vector.broadcast %1 : vector<1x8xf32> to vector<8x8xf32>
    %52 = arith.addf %50, %51 : vector<8x8xf32>
    %cst_29 = arith.constant dense<0xFF800000> : vector<8xf32>
    %53 = vector.multi_reduction <maximumf>, %52, %cst_29 [1] : vector<8x8xf32> to vector<8xf32>
    %54 = vector.shape_cast %53 : vector<8xf32> to vector<8x1xf32>
    %55 = vector.broadcast %54 : vector<8x1xf32> to vector<8x8xf32>
    %56 = arith.subf %52, %55 : vector<8x8xf32>
    %57 = math.exp %56 : vector<8x8xf32>
    %cst_30 = arith.constant dense<0.000000e+00> : vector<8xf32>
    %58 = vector.multi_reduction <add>, %57, %cst_30 [1] : vector<8x8xf32> to vector<8xf32>
    %59 = vector.shape_cast %58 : vector<8xf32> to vector<8x1xf32>
    %60 = arith.truncf %57 : vector<8x8xf32> to vector<8x8xbf16>
    %cst_31 = arith.constant dense<0.000000e+00> : vector<8x16xf32>
    %61 = tpu.matmul %60, %49, %cst_31 {dimension_numbers = #tpu.dot_dimension_numbers<[1], [0], [0], [1], [0, 0, 1, 1], [], []>} : vector<8x8xbf16>, vector<8x16xbf16>, vector<8x16xf32> -> vector<8x16xf32>
    %62 = tpu.reciprocal %59 {approx = true} : vector<8x1xf32> -> vector<8x1xf32>
    %63 = vector.broadcast %62 : vector<8x1xf32> to vector<8x16xf32>
    %64 = arith.mulf %61, %63 : vector<8x16xf32>
    %c0_32 = arith.constant 0 : index
    %c0_33 = arith.constant 0 : index
    %c48 = arith.constant 48 : index
    %65 = vector.load %arg1[%c0_32, %c0_33, %c48] : memref<1x8x192xbf16, #tpu.memory_space<vmem>>, vector<1x8x16xbf16>
    %66 = vector.shape_cast %65 : vector<1x8x16xbf16> to vector<8x16xbf16>
    %c0_34 = arith.constant 0 : index
    %c0_35 = arith.constant 0 : index
    %c112 = arith.constant 112 : index
    %67 = vector.load %arg1[%c0_34, %c0_35, %c112] : memref<1x8x192xbf16, #tpu.memory_space<vmem>>, vector<1x8x16xbf16>
    %68 = vector.shape_cast %67 : vector<1x8x16xbf16> to vector<8x16xbf16>
    %c0_36 = arith.constant 0 : index
    %c0_37 = arith.constant 0 : index
    %c176 = arith.constant 176 : index
    %69 = vector.load %arg1[%c0_36, %c0_37, %c176] : memref<1x8x192xbf16, #tpu.memory_space<vmem>>, vector<1x8x16xbf16>
    %70 = vector.shape_cast %69 : vector<1x8x16xbf16> to vector<8x16xbf16>
    %cst_38 = arith.constant dense<0.000000e+00> : vector<8x8xf32>
    %71 = tpu.matmul %66, %68, %cst_38 {dimension_numbers = #tpu.dot_dimension_numbers<[1], [1], [0], [0], [0, 0, 1, 0], [], []>} : vector<8x16xbf16>, vector<8x16xbf16>, vector<8x8xf32> -> vector<8x8xf32>
    %72 = vector.broadcast %1 : vector<1x8xf32> to vector<8x8xf32>
    %73 = arith.addf %71, %72 : vector<8x8xf32>
    %cst_39 = arith.constant dense<0xFF800000> : vector<8xf32>
    %74 = vector.multi_reduction <maximumf>, %73, %cst_39 [1] : vector<8x8xf32> to vector<8xf32>
    %75 = vector.shape_cast %74 : vector<8xf32> to vector<8x1xf32>
    %76 = vector.broadcast %75 : vector<8x1xf32> to vector<8x8xf32>
    %77 = arith.subf %73, %76 : vector<8x8xf32>
    %78 = math.exp %77 : vector<8x8xf32>
    %cst_40 = arith.constant dense<0.000000e+00> : vector<8xf32>
    %79 = vector.multi_reduction <add>, %78, %cst_40 [1] : vector<8x8xf32> to vector<8xf32>
    %80 = vector.shape_cast %79 : vector<8xf32> to vector<8x1xf32>
    %81 = arith.truncf %78 : vector<8x8xf32> to vector<8x8xbf16>
    %cst_41 = arith.constant dense<0.000000e+00> : vector<8x16xf32>
    %82 = tpu.matmul %81, %70, %cst_41 {dimension_numbers = #tpu.dot_dimension_numbers<[1], [0], [0], [1], [0, 0, 1, 1], [], []>} : vector<8x8xbf16>, vector<8x16xbf16>, vector<8x16xf32> -> vector<8x16xf32>
    %83 = tpu.reciprocal %80 {approx = true} : vector<8x1xf32> -> vector<8x1xf32>
    %84 = vector.broadcast %83 : vector<8x1xf32> to vector<8x16xf32>
    %85 = arith.mulf %82, %84 : vector<8x16xf32>
    %86 = tpu.concatenate %22, %43, %64, %85 in 1 : vector<8x16xf32>, vector<8x16xf32>, vector<8x16xf32>, vector<8x16xf32> -> vector<8x64xf32>
    %87 = arith.truncf %86 : vector<8x64xf32> to vector<8x64xbf16>
    %c0_42 = arith.constant 0 : index
    %c0_43 = arith.constant 0 : index
    %c0_44 = arith.constant 0 : index
    %88 = vector.load %arg3[%c0_42, %c0_43, %c0_44] : memref<1x8x64xbf16, #tpu.memory_space<vmem>>, vector<1x8x64xbf16>
    %89 = vector.shape_cast %88 : vector<1x8x64xbf16> to vector<8x64xbf16>
    %90 = vector.shape_cast %87 : vector<8x64xbf16> to vector<1x8x64xbf16>
    tpu.vector_store %arg3[%c0_42, %c0_43, %c0_44], %90 {strides = array<i32>} : memref<1x8x64xbf16, #tpu.memory_space<vmem>>, vector<1x8x64xbf16>,
    return
  }
  func.func @transform_0(%arg0: i32) -> (i32, i32, i32) {
    %c0_i32 = arith.constant 0 : i32
    %c0_i32_0 = arith.constant 0 : i32
    %c0_i32_1 = arith.constant 0 : i32
    return %arg0, %c0_i32, %c0_i32_0 : i32, i32, i32
  }
  func.func @transform_1(%arg0: i32) -> (i32, i32, i32) {
    %c0_i32 = arith.constant 0 : i32
    %c0_i32_0 = arith.constant 0 : i32
    %c0_i32_1 = arith.constant 0 : i32
    return %arg0, %c0_i32, %c0_i32_0 : i32, i32, i32
  }
  func.func @transform_2(%arg0: i32) -> (i32, i32, i32) {
    %c0_i32 = arith.constant 0 : i32
    %c0_i32_0 = arith.constant 0 : i32
    %c0_i32_1 = arith.constant 0 : i32
    return %arg0, %c0_i32, %c0_i32_0 : i32, i32, i32
  }
}

module attributes {stable_mosaic.version = 11 : i64} {
  func.func @_linear_kernel(%arg0: i32, %arg1: memref<16x64xbf16, #tpu.memory_space<vmem>>, %arg2: memref<64x192xbf16, #tpu.memory_space<vmem>>, %arg3: memref<1x192xf32, #tpu.memory_space<vmem>>, %arg4: memref<16x192xbf16, #tpu.memory_space<vmem>>) attributes {dimension_semantics = [#tpu.dimension_semantics<parallel>], iteration_bounds = array<i64: 1>, scalar_prefetch = 0 : i64, scratch_operands = 0 : i64, tpu.core_type = #tpu.core_type<tc>, window_params = [{transform_indices = @transform_0, window_bounds = array<i64: 16, 64>}, {pipeline_mode = #tpu.pipeline_mode<synchronous>, transform_indices = @transform_1, window_bounds = array<i64: 64, 192>}, {pipeline_mode = #tpu.pipeline_mode<synchronous>, transform_indices = @transform_2, window_bounds = array<i64: 1, 192>}, {transform_indices = @transform_3, window_bounds = array<i64: 16, 192>}]} {
    %c0 = arith.constant 0 : index
    %c0_0 = arith.constant 0 : index
    %0 = vector.load %arg1[%c0, %c0_0] : memref<16x64xbf16, #tpu.memory_space<vmem>>, vector<16x64xbf16>
    %c0_1 = arith.constant 0 : index
    %c0_2 = arith.constant 0 : index
    %1 = vector.load %arg2[%c0_1, %c0_2] : memref<64x192xbf16, #tpu.memory_space<vmem>>, vector<64x192xbf16>
    %cst = arith.constant dense<0.000000e+00> : vector<16x192xf32>
    %2 = tpu.matmul %0, %1, %cst {dimension_numbers = #tpu.dot_dimension_numbers<[1], [0], [0], [1], [0, 0, 1, 1], [], []>} : vector<16x64xbf16>, vector<64x192xbf16>, vector<16x192xf32> -> vector<16x192xf32>
    %c0_3 = arith.constant 0 : index
    %c0_4 = arith.constant 0 : index
    %3 = vector.load %arg3[%c0_3, %c0_4] : memref<1x192xf32, #tpu.memory_space<vmem>>, vector<1x192xf32>
    %4 = vector.broadcast %3 : vector<1x192xf32> to vector<16x192xf32>
    %5 = arith.addf %2, %4 : vector<16x192xf32>
    %6 = arith.truncf %5 : vector<16x192xf32> to vector<16x192xbf16>
    %c0_5 = arith.constant 0 : index
    %c0_6 = arith.constant 0 : index
    %7 = vector.load %arg4[%c0_5, %c0_6] : memref<16x192xbf16, #tpu.memory_space<vmem>>, vector<16x192xbf16>
    tpu.vector_store %arg4[%c0_5, %c0_6], %6 {strides = array<i32>} : memref<16x192xbf16, #tpu.memory_space<vmem>>, vector<16x192xbf16>,
    return
  }
  func.func @transform_0(%arg0: i32) -> (i32, i32) {
    %c0_i32 = arith.constant 0 : i32
    %c0_i32_0 = arith.constant 0 : i32
    return %arg0, %c0_i32 : i32, i32
  }
  func.func @transform_1(%arg0: i32) -> (i32, i32) {
    %c0_i32 = arith.constant 0 : i32
    %c0_i32_0 = arith.constant 0 : i32
    %c0_i32_1 = arith.constant 0 : i32
    return %c0_i32, %c0_i32_0 : i32, i32
  }
  func.func @transform_2(%arg0: i32) -> (i32, i32) {
    %c0_i32 = arith.constant 0 : i32
    %c0_i32_0 = arith.constant 0 : i32
    %c0_i32_1 = arith.constant 0 : i32
    return %c0_i32, %c0_i32_0 : i32, i32
  }
  func.func @transform_3(%arg0: i32) -> (i32, i32) {
    %c0_i32 = arith.constant 0 : i32
    %c0_i32_0 = arith.constant 0 : i32
    return %arg0, %c0_i32 : i32, i32
  }
}

module attributes {stable_mosaic.version = 11 : i64} {
  func.func @_linear_kernel(%arg0: i32, %arg1: memref<16x128xbf16, #tpu.memory_space<vmem>>, %arg2: memref<128x64xbf16, #tpu.memory_space<vmem>>, %arg3: memref<1x64xf32, #tpu.memory_space<vmem>>, %arg4: memref<16x64xbf16, #tpu.memory_space<vmem>>, %arg5: memref<1x64xf32, #tpu.memory_space<vmem>>, %arg6: memref<1x64xf32, #tpu.memory_space<vmem>>, %arg7: memref<16x64xbf16, #tpu.memory_space<vmem>>) attributes {dimension_semantics = [#tpu.dimension_semantics<parallel>], iteration_bounds = array<i64: 1>, scalar_prefetch = 0 : i64, scratch_operands = 0 : i64, tpu.core_type = #tpu.core_type<tc>, window_params = [{transform_indices = @transform_0, window_bounds = array<i64: 16, 128>}, {pipeline_mode = #tpu.pipeline_mode<synchronous>, transform_indices = @transform_1, window_bounds = array<i64: 128, 64>}, {pipeline_mode = #tpu.pipeline_mode<synchronous>, transform_indices = @transform_2, window_bounds = array<i64: 1, 64>}, {transform_indices = @transform_3, window_bounds = array<i64: 16, 64>}, {pipeline_mode = #tpu.pipeline_mode<synchronous>, transform_indices = @transform_4, window_bounds = array<i64: 1, 64>}, {pipeline_mode = #tpu.pipeline_mode<synchronous>, transform_indices = @transform_5, window_bounds = array<i64: 1, 64>}, {transform_indices = @transform_6, window_bounds = array<i64: 16, 64>}]} {
    %c0 = arith.constant 0 : index
    %c0_0 = arith.constant 0 : index
    %0 = vector.load %arg1[%c0, %c0_0] : memref<16x128xbf16, #tpu.memory_space<vmem>>, vector<16x128xbf16>
    %c0_1 = arith.constant 0 : index
    %c0_2 = arith.constant 0 : index
    %1 = vector.load %arg2[%c0_1, %c0_2] : memref<128x64xbf16, #tpu.memory_space<vmem>>, vector<128x64xbf16>
    %cst = arith.constant dense<0.000000e+00> : vector<16x64xf32>
    %2 = tpu.matmul %0, %1, %cst {dimension_numbers = #tpu.dot_dimension_numbers<[1], [0], [0], [1], [0, 0, 1, 1], [], []>} : vector<16x128xbf16>, vector<128x64xbf16>, vector<16x64xf32> -> vector<16x64xf32>
    %c0_3 = arith.constant 0 : index
    %c0_4 = arith.constant 0 : index
    %3 = vector.load %arg3[%c0_3, %c0_4] : memref<1x64xf32, #tpu.memory_space<vmem>>, vector<1x64xf32>
    %4 = vector.broadcast %3 : vector<1x64xf32> to vector<16x64xf32>
    %5 = arith.addf %2, %4 : vector<16x64xf32>
    %c0_5 = arith.constant 0 : index
    %c0_6 = arith.constant 0 : index
    %6 = vector.load %arg4[%c0_5, %c0_6] : memref<16x64xbf16, #tpu.memory_space<vmem>>, vector<16x64xbf16>
    %7 = arith.extf %6 : vector<16x64xbf16> to vector<16x64xf32>
    %8 = arith.addf %5, %7 : vector<16x64xf32>
    %cst_7 = arith.constant dense<0.000000e+00> : vector<16xf32>
    %9 = vector.multi_reduction <add>, %8, %cst_7 [1] : vector<16x64xf32> to vector<16xf32>
    %10 = vector.shape_cast %9 : vector<16xf32> to vector<16x1xf32>
    %cst_8 = arith.constant 6.400000e+01 : f32
    %11 = vector.broadcast %cst_8 : f32 to vector<16x1xf32>
    %12 = arith.divf %10, %11 : vector<16x1xf32>
    %13 = vector.broadcast %12 : vector<16x1xf32> to vector<16x64xf32>
    %14 = arith.subf %8, %13 : vector<16x64xf32>
    %15 = arith.mulf %14, %14 : vector<16x64xf32>
    %cst_9 = arith.constant dense<0.000000e+00> : vector<16xf32>
    %16 = vector.multi_reduction <add>, %15, %cst_9 [1] : vector<16x64xf32> to vector<16xf32>
    %17 = vector.shape_cast %16 : vector<16xf32> to vector<16x1xf32>
    %cst_10 = arith.constant 6.400000e+01 : f32
    %18 = vector.broadcast %cst_10 : f32 to vector<16x1xf32>
    %19 = arith.divf %17, %18 : vector<16x1xf32>
    %20 = vector.broadcast %12 : vector<16x1xf32> to vector<16x64xf32>
    %21 = arith.subf %8, %20 : vector<16x64xf32>
    %cst_11 = arith.constant 9.99999996E-13 : f32
    %22 = vector.broadcast %cst_11 : f32 to vector<16x1xf32>
    %23 = arith.addf %19, %22 : vector<16x1xf32>
    %24 = math.rsqrt %23 : vector<16x1xf32>
    %25 = vector.broadcast %24 : vector<16x1xf32> to vector<16x64xf32>
    %26 = arith.mulf %21, %25 : vector<16x64xf32>
    %c0_12 = arith.constant 0 : index
    %c0_13 = arith.constant 0 : index
    %27 = vector.load %arg5[%c0_12, %c0_13] : memref<1x64xf32, #tpu.memory_space<vmem>>, vector<1x64xf32>
    %28 = vector.broadcast %27 : vector<1x64xf32> to vector<16x64xf32>
    %29 = arith.mulf %26, %28 : vector<16x64xf32>
    %c0_14 = arith.constant 0 : index
    %c0_15 = arith.constant 0 : index
    %30 = vector.load %arg6[%c0_14, %c0_15] : memref<1x64xf32, #tpu.memory_space<vmem>>, vector<1x64xf32>
    %31 = vector.broadcast %30 : vector<1x64xf32> to vector<16x64xf32>
    %32 = arith.addf %29, %31 : vector<16x64xf32>
    %33 = arith.truncf %32 : vector<16x64xf32> to vector<16x64xbf16>
    %c0_16 = arith.constant 0 : index
    %c0_17 = arith.constant 0 : index
    %34 = vector.load %arg7[%c0_16, %c0_17] : memref<16x64xbf16, #tpu.memory_space<vmem>>, vector<16x64xbf16>
    tpu.vector_store %arg7[%c0_16, %c0_17], %33 {strides = array<i32>} : memref<16x64xbf16, #tpu.memory_space<vmem>>, vector<16x64xbf16>,
    return
  }
  func.func @transform_0(%arg0: i32) -> (i32, i32) {
    %c0_i32 = arith.constant 0 : i32
    %c0_i32_0 = arith.constant 0 : i32
    return %arg0, %c0_i32 : i32, i32
  }
  func.func @transform_1(%arg0: i32) -> (i32, i32) {
    %c0_i32 = arith.constant 0 : i32
    %c0_i32_0 = arith.constant 0 : i32
    %c0_i32_1 = arith.constant 0 : i32
    return %c0_i32, %c0_i32_0 : i32, i32
  }
  func.func @transform_2(%arg0: i32) -> (i32, i32) {
    %c0_i32 = arith.constant 0 : i32
    %c0_i32_0 = arith.constant 0 : i32
    %c0_i32_1 = arith.constant 0 : i32
    return %c0_i32, %c0_i32_0 : i32, i32
  }
  func.func @transform_3(%arg0: i32) -> (i32, i32) {
    %c0_i32 = arith.constant 0 : i32
    %c0_i32_0 = arith.constant 0 : i32
    return %arg0, %c0_i32 : i32, i32
  }
  func.func @transform_4(%arg0: i32) -> (i32, i32) {
    %c0_i32 = arith.constant 0 : i32
    %c0_i32_0 = arith.constant 0 : i32
    %c0_i32_1 = arith.constant 0 : i32
    return %c0_i32, %c0_i32_0 : i32, i32
  }
  func.func @transform_5(%arg0: i32) -> (i32, i32) {
    %c0_i32 = arith.constant 0 : i32
    %c0_i32_0 = arith.constant 0 : i32
    %c0_i32_1 = arith.constant 0 : i32
    return %c0_i32, %c0_i32_0 : i32, i32
  }
  func.func @transform_6(%arg0: i32) -> (i32, i32) {
    %c0_i32 = arith.constant 0 : i32
    %c0_i32_0 = arith.constant 0 : i32
    return %arg0, %c0_i32 : i32, i32
  }
}

module attributes {stable_mosaic.version = 11 : i64} {
  func.func @_linear_kernel(%arg0: i32, %arg1: memref<16x64xbf16, #tpu.memory_space<vmem>>, %arg2: memref<64x128xbf16, #tpu.memory_space<vmem>>, %arg3: memref<1x128xf32, #tpu.memory_space<vmem>>, %arg4: memref<16x128xbf16, #tpu.memory_space<vmem>>) attributes {dimension_semantics = [#tpu.dimension_semantics<parallel>], iteration_bounds = array<i64: 1>, scalar_prefetch = 0 : i64, scratch_operands = 0 : i64, tpu.core_type = #tpu.core_type<tc>, window_params = [{transform_indices = @transform_0, window_bounds = array<i64: 16, 64>}, {pipeline_mode = #tpu.pipeline_mode<synchronous>, transform_indices = @transform_1, window_bounds = array<i64: 64, 128>}, {pipeline_mode = #tpu.pipeline_mode<synchronous>, transform_indices = @transform_2, window_bounds = array<i64: 1, 128>}, {transform_indices = @transform_3, window_bounds = array<i64: 16, 128>}]} {
    %c0 = arith.constant 0 : index
    %c0_0 = arith.constant 0 : index
    %0 = vector.load %arg1[%c0, %c0_0] : memref<16x64xbf16, #tpu.memory_space<vmem>>, vector<16x64xbf16>
    %c0_1 = arith.constant 0 : index
    %c0_2 = arith.constant 0 : index
    %1 = vector.load %arg2[%c0_1, %c0_2] : memref<64x128xbf16, #tpu.memory_space<vmem>>, vector<64x128xbf16>
    %cst = arith.constant dense<0.000000e+00> : vector<16x128xf32>
    %2 = tpu.matmul %0, %1, %cst {dimension_numbers = #tpu.dot_dimension_numbers<[1], [0], [0], [1], [0, 0, 1, 1], [], []>} : vector<16x64xbf16>, vector<64x128xbf16>, vector<16x128xf32> -> vector<16x128xf32>
    %c0_3 = arith.constant 0 : index
    %c0_4 = arith.constant 0 : index
    %3 = vector.load %arg3[%c0_3, %c0_4] : memref<1x128xf32, #tpu.memory_space<vmem>>, vector<1x128xf32>
    %4 = vector.broadcast %3 : vector<1x128xf32> to vector<16x128xf32>
    %5 = arith.addf %2, %4 : vector<16x128xf32>
    %cst_5 = arith.constant 5.000000e-01 : f32
    %6 = vector.broadcast %cst_5 : f32 to vector<16x128xf32>
    %7 = arith.mulf %6, %5 : vector<16x128xf32>
    %cst_6 = arith.constant 4.471500e-02 : f32
    %8 = vector.broadcast %cst_6 : f32 to vector<16x128xf32>
    %9 = arith.mulf %8, %5 : vector<16x128xf32>
    %10 = arith.mulf %9, %5 : vector<16x128xf32>
    %11 = arith.mulf %10, %5 : vector<16x128xf32>
    %12 = arith.addf %5, %11 : vector<16x128xf32>
    %cst_7 = arith.constant 0.797884583 : f32
    %13 = vector.broadcast %cst_7 : f32 to vector<16x128xf32>
    %14 = arith.mulf %13, %12 : vector<16x128xf32>
    %15 = math.tanh %14 : vector<16x128xf32>
    %cst_8 = arith.constant 1.000000e+00 : f32
    %16 = vector.broadcast %cst_8 : f32 to vector<16x128xf32>
    %17 = arith.addf %16, %15 : vector<16x128xf32>
    %18 = arith.mulf %7, %17 : vector<16x128xf32>
    %19 = arith.truncf %18 : vector<16x128xf32> to vector<16x128xbf16>
    %c0_9 = arith.constant 0 : index
    %c0_10 = arith.constant 0 : index
    %20 = vector.load %arg4[%c0_9, %c0_10] : memref<16x128xbf16, #tpu.memory_space<vmem>>, vector<16x128xbf16>
    tpu.vector_store %arg4[%c0_9, %c0_10], %19 {strides = array<i32>} : memref<16x128xbf16, #tpu.memory_space<vmem>>, vector<16x128xbf16>,
    return
  }
  func.func @transform_0(%arg0: i32) -> (i32, i32) {
    %c0_i32 = arith.constant 0 : i32
    %c0_i32_0 = arith.constant 0 : i32
    return %arg0, %c0_i32 : i32, i32
  }
  func.func @transform_1(%arg0: i32) -> (i32, i32) {
    %c0_i32 = arith.constant 0 : i32
    %c0_i32_0 = arith.constant 0 : i32
    %c0_i32_1 = arith.constant 0 : i32
    return %c0_i32, %c0_i32_0 : i32, i32
  }
  func.func @transform_2(%arg0: i32) -> (i32, i32) {
    %c0_i32 = arith.constant 0 : i32
    %c0_i32_0 = arith.constant 0 : i32
    %c0_i32_1 = arith.constant 0 : i32
    return %c0_i32, %c0_i32_0 : i32, i32
  }
  func.func @transform_3(%arg0: i32) -> (i32, i32) {
    %c0_i32 = arith.constant 0 : i32
    %c0_i32_0 = arith.constant 0 : i32
    return %arg0, %c0_i32 : i32, i32
  }
}

module attributes {stable_mosaic.version = 11 : i64} {
  func.func @_linear_kernel(%arg0: i32, %arg1: memref<16x64xbf16, #tpu.memory_space<vmem>>, %arg2: memref<64x128xbf16, #tpu.memory_space<vmem>>, %arg3: memref<1x128xf32, #tpu.memory_space<vmem>>, %arg4: memref<16x128xbf16, #tpu.memory_space<vmem>>) attributes {dimension_semantics = [#tpu.dimension_semantics<parallel>], iteration_bounds = array<i64: 1>, scalar_prefetch = 0 : i64, scratch_operands = 0 : i64, tpu.core_type = #tpu.core_type<tc>, window_params = [{transform_indices = @transform_0, window_bounds = array<i64: 16, 64>}, {pipeline_mode = #tpu.pipeline_mode<synchronous>, transform_indices = @transform_1, window_bounds = array<i64: 64, 128>}, {pipeline_mode = #tpu.pipeline_mode<synchronous>, transform_indices = @transform_2, window_bounds = array<i64: 1, 128>}, {transform_indices = @transform_3, window_bounds = array<i64: 16, 128>}]} {
    %c0 = arith.constant 0 : index
    %c0_0 = arith.constant 0 : index
    %0 = vector.load %arg1[%c0, %c0_0] : memref<16x64xbf16, #tpu.memory_space<vmem>>, vector<16x64xbf16>
    %c0_1 = arith.constant 0 : index
    %c0_2 = arith.constant 0 : index
    %1 = vector.load %arg2[%c0_1, %c0_2] : memref<64x128xbf16, #tpu.memory_space<vmem>>, vector<64x128xbf16>
    %cst = arith.constant dense<0.000000e+00> : vector<16x128xf32>
    %2 = tpu.matmul %0, %1, %cst {dimension_numbers = #tpu.dot_dimension_numbers<[1], [0], [0], [1], [0, 0, 1, 1], [], []>} : vector<16x64xbf16>, vector<64x128xbf16>, vector<16x128xf32> -> vector<16x128xf32>
    %c0_3 = arith.constant 0 : index
    %c0_4 = arith.constant 0 : index
    %3 = vector.load %arg3[%c0_3, %c0_4] : memref<1x128xf32, #tpu.memory_space<vmem>>, vector<1x128xf32>
    %4 = vector.broadcast %3 : vector<1x128xf32> to vector<16x128xf32>
    %5 = arith.addf %2, %4 : vector<16x128xf32>
    %cst_5 = arith.constant 5.000000e-01 : f32
    %6 = vector.broadcast %cst_5 : f32 to vector<16x128xf32>
    %7 = arith.mulf %6, %5 : vector<16x128xf32>
    %cst_6 = arith.constant 4.471500e-02 : f32
    %8 = vector.broadcast %cst_6 : f32 to vector<16x128xf32>
    %9 = arith.mulf %8, %5 : vector<16x128xf32>
    %10 = arith.mulf %9, %5 : vector<16x128xf32>
    %11 = arith.mulf %10, %5 : vector<16x128xf32>
    %12 = arith.addf %5, %11 : vector<16x128xf32>
    %cst_7 = arith.constant 0.797884583 : f32
    %13 = vector.broadcast %cst_7 : f32 to vector<16x128xf32>
    %14 = arith.mulf %13, %12 : vector<16x128xf32>
    %15 = math.tanh %14 : vector<16x128xf32>
    %cst_8 = arith.constant 1.000000e+00 : f32
    %16 = vector.broadcast %cst_8 : f32 to vector<16x128xf32>
    %17 = arith.addf %16, %15 : vector<16x128xf32>
    %18 = arith.mulf %7, %17 : vector<16x128xf32>
    %19 = arith.truncf %18 : vector<16x128xf32> to vector<16x128xbf16>
    %c0_9 = arith.constant 0 : index
    %c0_10 = arith.constant 0 : index
    %20 = vector.load %arg4[%c0_9, %c0_10] : memref<16x128xbf16, #tpu.memory_space<vmem>>, vector<16x128xbf16>
    tpu.vector_store %arg4[%c0_9, %c0_10], %19 {strides = array<i32>} : memref<16x128xbf16, #tpu.memory_space<vmem>>, vector<16x128xbf16>,
    return
  }
  func.func @transform_0(%arg0: i32) -> (i32, i32) {
    %c0_i32 = arith.constant 0 : i32
    %c0_i32_0 = arith.constant 0 : i32
    return %arg0, %c0_i32 : i32, i32
  }
  func.func @transform_1(%arg0: i32) -> (i32, i32) {
    %c0_i32 = arith.constant 0 : i32
    %c0_i32_0 = arith.constant 0 : i32
    %c0_i32_1 = arith.constant 0 : i32
    return %c0_i32, %c0_i32_0 : i32, i32
  }
  func.func @transform_2(%arg0: i32) -> (i32, i32) {
    %c0_i32 = arith.constant 0 : i32
    %c0_i32_0 = arith.constant 0 : i32
    %c0_i32_1 = arith.constant 0 : i32
    return %c0_i32, %c0_i32_0 : i32, i32
  }
  func.func @transform_3(%arg0: i32) -> (i32, i32) {
    %c0_i32 = arith.constant 0 : i32
    %c0_i32_0 = arith.constant 0 : i32
    return %arg0, %c0_i32 : i32, i32
  }
}

module attributes {stable_mosaic.version = 11 : i64} {
  func.func @_linear_kernel(%arg0: i32, %arg1: memref<2x64xbf16, #tpu.memory_space<vmem>>, %arg2: memref<64x128xbf16, #tpu.memory_space<vmem>>, %arg3: memref<1x128xf32, #tpu.memory_space<vmem>>, %arg4: memref<2x128xf32, #tpu.memory_space<vmem>>) attributes {dimension_semantics = [#tpu.dimension_semantics<parallel>], iteration_bounds = array<i64: 1>, scalar_prefetch = 0 : i64, scratch_operands = 0 : i64, tpu.core_type = #tpu.core_type<tc>, window_params = [{transform_indices = @transform_0, window_bounds = array<i64: 2, 64>}, {pipeline_mode = #tpu.pipeline_mode<synchronous>, transform_indices = @transform_1, window_bounds = array<i64: 64, 128>}, {pipeline_mode = #tpu.pipeline_mode<synchronous>, transform_indices = @transform_2, window_bounds = array<i64: 1, 128>}, {transform_indices = @transform_3, window_bounds = array<i64: 2, 128>}]} {
    %c0 = arith.constant 0 : index
    %c0_0 = arith.constant 0 : index
    %0 = vector.load %arg1[%c0, %c0_0] : memref<2x64xbf16, #tpu.memory_space<vmem>>, vector<2x64xbf16>
    %c0_1 = arith.constant 0 : index
    %c0_2 = arith.constant 0 : index
    %1 = vector.load %arg2[%c0_1, %c0_2] : memref<64x128xbf16, #tpu.memory_space<vmem>>, vector<64x128xbf16>
    %cst = arith.constant dense<0.000000e+00> : vector<2x128xf32>
    %2 = tpu.matmul %0, %1, %cst {dimension_numbers = #tpu.dot_dimension_numbers<[1], [0], [0], [1], [0, 0, 1, 1], [], []>} : vector<2x64xbf16>, vector<64x128xbf16>, vector<2x128xf32> -> vector<2x128xf32>
    %c0_3 = arith.constant 0 : index
    %c0_4 = arith.constant 0 : index
    %3 = vector.load %arg3[%c0_3, %c0_4] : memref<1x128xf32, #tpu.memory_space<vmem>>, vector<1x128xf32>
    %4 = vector.broadcast %3 : vector<1x128xf32> to vector<2x128xf32>
    %5 = arith.addf %2, %4 : vector<2x128xf32>
    %c0_5 = arith.constant 0 : index
    %c0_6 = arith.constant 0 : index
    %6 = vector.load %arg4[%c0_5, %c0_6] : memref<2x128xf32, #tpu.memory_space<vmem>>, vector<2x128xf32>
    tpu.vector_store %arg4[%c0_5, %c0_6], %5 {strides = array<i32>} : memref<2x128xf32, #tpu.memory_space<vmem>>, vector<2x128xf32>,
    return
  }
  func.func @transform_0(%arg0: i32) -> (i32, i32) {
    %c0_i32 = arith.constant 0 : i32
    %c0_i32_0 = arith.constant 0 : i32
    return %arg0, %c0_i32 : i32, i32
  }
  func.func @transform_1(%arg0: i32) -> (i32, i32) {
    %c0_i32 = arith.constant 0 : i32
    %c0_i32_0 = arith.constant 0 : i32
    %c0_i32_1 = arith.constant 0 : i32
    return %c0_i32, %c0_i32_0 : i32, i32
  }
  func.func @transform_2(%arg0: i32) -> (i32, i32) {
    %c0_i32 = arith.constant 0 : i32
    %c0_i32_0 = arith.constant 0 : i32
    %c0_i32_1 = arith.constant 0 : i32
    return %c0_i32, %c0_i32_0 : i32, i32
  }
  func.func @transform_3(%arg0: i32) -> (i32, i32) {
    %c0_i32 = arith.constant 0 : i32
    %c0_i32_0 = arith.constant 0 : i32
    return %arg0, %c0_i32 : i32, i32
  }
}

</mosaic_0001>

<llo_original>
// kernel: distilbert_classifier_forward.12
$region0: #{distilbert_classifier_forward.12}
  #allocation0 [shape = 'u32[]', space=smem, size = 0x4, offset = 0x4, fixed_abs, tag = 'smem constant byte address 0x4 - core index']
  #allocation1 [shape = 'u32[72,128]{1,0:T(1,128)}', space=vmem, size = 0x9000, scoped, tag = 'internal scratch']
  %s0 = inlined_call_operand.vmem [shape: bf16[16,64], index: 0, kind: input, shape index: {}]
  %s1 = inlined_call_operand.vmem [shape: f32[1,64], index: 1, kind: input, shape index: {}]
  %s2 = inlined_call_operand.vmem [shape: f32[1,64], index: 2, kind: input, shape index: {}]
  %s3 = inlined_call_operand.vmem [shape: bf16[16,64], index: 3, kind: output, shape index: {}]
  %s4 = sld [smem:[#allocation0]]
  $region22: #{distilbert_classifier_forward.12} parent=0
    _
  %s6 = ssub.s32 1, %s4
  %s7 = scalar_select 0, %s6, %s4
  // Predicated region
  $region2: #{distilbert_classifier_forward.12} parent=0 // pred_check
    _
  $region3: #{distilbert_classifier_forward.12} parent=0 // pred_check_branch
    %9 = sbr.rel (0) target = $region5
  $region4: #{distilbert_classifier_forward.12} parent=0 // pred_region
    _
  $region5: #{distilbert_classifier_forward.12} parent=0 // pred_fallthru
    _
  // Predicated region
  $region6: #{distilbert_classifier_forward.12} parent=0 // pred_check
    _
  $region7: #{distilbert_classifier_forward.12} parent=0 // pred_check_branch
    %11 = sbr.rel (0) target = $region9
  $region8: #{distilbert_classifier_forward.12} parent=0 // pred_region
    _
  $region9: #{distilbert_classifier_forward.12} parent=0 // pred_fallthru
    _
  // Predicated region
  $region10: #{distilbert_classifier_forward.12} parent=0 // pred_check
    _
  $region11: #{distilbert_classifier_forward.12} parent=0 // pred_check_branch
    %13 = sbr.rel (0) target = $region13
  $region12: #{distilbert_classifier_forward.12} parent=0 // pred_region
    _
  $region13: #{distilbert_classifier_forward.12} parent=0 // pred_fallthru
    _
  %v14 = vld [vmem:[%s0] sm:$0xf]
  %v15 = vld [vmem:[%s0 + $0x4] sm:$0xf]
  %v16 = vunpack.c.l.bf16 %v14
  %v17 = vunpack.c.l.bf16 %v15
  %vm18 = vcmask 523264
  %v19 = vsel %vm18, %v16, 0.0
  %20 = vadd.xlane.f32.xlu0 %v19
  %v21 = vpop.xlane.xlu0 %20
  %v22 = vsel %vm18, %v17, 0.0
  %23 = vadd.xlane.f32.xlu0 %v22
  %v24 = vpop.xlane.xlu0 %23
  %v25 = vrcp.pop 64.0
  %v26 = vmul.f32 64.0, %v25
  %v27 = vsub.f32 1.0, %v26
  %v28 = vmul.f32 %v25, %v27
  %v29 = vadd.f32 %v25, %v28
  %vm30 = vweird.f32 %v25
  %v31 = vsel %vm30, %v25, %v29
  %v32 = vmul.f32 %v21, %v31
  %v33 = vmul.f32 %v24, %v31
  %v34 = vsub.f32 %v16, %v32
  %v35 = vsub.f32 %v17, %v33
  %v36 = vmul.f32 %v34, %v34
  %v37 = vmul.f32 %v35, %v35
  %v38 = vsel %vm18, %v36, 0.0
  %39 = vadd.xlane.f32.xlu0 %v38
  %v40 = vpop.xlane.xlu0 %39
  %v41 = vsel %vm18, %v37, 0.0
  %42 = vadd.xlane.f32.xlu0 %v41
  %v43 = vpop.xlane.xlu0 %42
  %v44 = vmul.f32 %v40, %v31
  %v45 = vmul.f32 %v43, %v31
  %v46 = vadd.f32 %v44, 1e-12
  %v47 = vadd.f32 %v45, 1e-12
  %v48 = vrsqrt.pop %v46
  %v49 = vmul.f32 %v48, %v46
  %v50 = vmul.f32 %v49, %v48
  %v51 = vmul.f32 0.5, %v50
  %v52 = vsub.f32 1.5, %v51
  %v53 = vmul.f32 %v48, %v52
  %vm54 = vweird.f32 %v46
  %vm55 = vweird.f32 %v48
  %vm56 = vmor %vm54, %vm55
  %v57 = vsel %vm56, %v48, %v53
  %v58 = vrsqrt.pop %v47
  %v59 = vmul.f32 %v58, %v47
  %v60 = vmul.f32 %v59, %v58
  %v61 = vmul.f32 0.5, %v60
  %v62 = vsub.f32 1.5, %v61
  %v63 = vmul.f32 %v58, %v62
  %vm64 = vweird.f32 %v47
  %vm65 = vweird.f32 %v58
  %vm66 = vmor %vm64, %vm65
  %v67 = vsel %vm66, %v58, %v63
  %v68 = vmul.f32 %v34, %v57
  %v69 = vmul.f32 %v35, %v67
  %v70 = vld [vmem:[%s1] sm:$0x1]
  %v72 = vperm.slane %v70, 0
  %v74 = vmul.f32 %v68, %v72
  %v75 = vmul.f32 %v69, %v72
  %v76 = vld [vmem:[%s2] sm:$0x1]
  %v78 = vperm.slane %v76, 0
  %v80 = vadd.f32 %v74, %v78
  %v81 = vadd.f32 %v75, %v78
  %v82 = vpack.c.bf16 %v80, %v80
  %v83 = vpack.c.bf16 %v81, %v81
  %vm84 = vcmask 519168
  %85 = vst.msk [vmem:[%s3] sm:$0xf] %vm84, %v82
  %86 = vst.msk [vmem:[%s3 + $0x4] sm:$0xf] %vm84, %v83
  // Predicated region
  $region14: #{distilbert_classifier_forward.12} parent=0 // pred_check
    _
  $region15: #{distilbert_classifier_forward.12} parent=0 // pred_check_branch
    %88 = sbr.rel (0) target = $region17
  $region16: #{distilbert_classifier_forward.12} parent=0 // pred_region
    _
  $region17: #{distilbert_classifier_forward.12} parent=0 // pred_fallthru
    _
  // Predicated region
  $region18: #{distilbert_classifier_forward.12} parent=0 // pred_check
    _
  $region19: #{distilbert_classifier_forward.12} parent=0 // pred_check_branch
    %90 = sbr.rel (0) target = $region21
  $region20: #{distilbert_classifier_forward.12} parent=0 // pred_region
    _
  $region21: #{distilbert_classifier_forward.12} parent=0 // pred_fallthru
    _

// kernel: distilbert_classifier_forward.15
$region0: #{distilbert_classifier_forward.15}
  #allocation0 [shape = 'u32[]', space=smem, size = 0x4, offset = 0x4, fixed_abs, tag = 'smem constant byte address 0x4 - core index']
  #allocation1 [shape = 'u32[72,128]{1,0:T(1,128)}', space=vmem, size = 0x9000, scoped, tag = 'internal scratch']
  %s0 = inlined_call_operand.vmem [shape: bf16[16,64], index: 0, kind: input, shape index: {}]
  %s1 = inlined_call_operand.vmem [shape: bf16[64,64], index: 1, kind: input, shape index: {}]
  %s2 = inlined_call_operand.vmem [shape: f32[1,64], index: 2, kind: input, shape index: {}]
  %s3 = inlined_call_operand.vmem [shape: bf16[16,64], index: 3, kind: input, shape index: {}]
  %s4 = inlined_call_operand.vmem [shape: f32[1,64], index: 4, kind: input, shape index: {}]
  %s5 = inlined_call_operand.vmem [shape: f32[1,64], index: 5, kind: input, shape index: {}]
  %s6 = inlined_call_operand.vmem [shape: bf16[16,64], index: 6, kind: output, shape index: {}]
  %s7 = sld [smem:[#allocation0]]
  $region34: #{distilbert_classifier_forward.15} parent=0
    _
  %s9 = ssub.s32 1, %s7
  %s10 = scalar_select 0, %s9, %s7
  // Predicated region
  $region2: #{distilbert_classifier_forward.15} parent=0 // pred_check
    _
  $region3: #{distilbert_classifier_forward.15} parent=0 // pred_check_branch
    %12 = sbr.rel (0) target = $region5
  $region4: #{distilbert_classifier_forward.15} parent=0 // pred_region
    _
  $region5: #{distilbert_classifier_forward.15} parent=0 // pred_fallthru
    _
  // Predicated region
  $region6: #{distilbert_classifier_forward.15} parent=0 // pred_check
    _
  $region7: #{distilbert_classifier_forward.15} parent=0 // pred_check_branch
    %14 = sbr.rel (0) target = $region9
  $region8: #{distilbert_classifier_forward.15} parent=0 // pred_region
    _
  $region9: #{distilbert_classifier_forward.15} parent=0 // pred_fallthru
    _
  // Predicated region
  $region10: #{distilbert_classifier_forward.15} parent=0 // pred_check
    _
  $region11: #{distilbert_classifier_forward.15} parent=0 // pred_check_branch
    %16 = sbr.rel (0) target = $region13
  $region12: #{distilbert_classifier_forward.15} parent=0 // pred_region
    _
  $region13: #{distilbert_classifier_forward.15} parent=0 // pred_fallthru
    _
  // Predicated region
  $region14: #{distilbert_classifier_forward.15} parent=0 // pred_check
    _
  $region15: #{distilbert_classifier_forward.15} parent=0 // pred_check_branch
    %18 = sbr.rel (0) target = $region17
  $region16: #{distilbert_classifier_forward.15} parent=0 // pred_region
    _
  $region17: #{distilbert_classifier_forward.15} parent=0 // pred_fallthru
    _
  // Predicated region
  $region18: #{distilbert_classifier_forward.15} parent=0 // pred_check
    _
  $region19: #{distilbert_classifier_forward.15} parent=0 // pred_check_branch
    %20 = sbr.rel (0) target = $region21
  $region20: #{distilbert_classifier_forward.15} parent=0 // pred_region
    _
  $region21: #{distilbert_classifier_forward.15} parent=0 // pred_fallthru
    _
  // Predicated region
  $region22: #{distilbert_classifier_forward.15} parent=0 // pred_check
    _
  $region23: #{distilbert_classifier_forward.15} parent=0 // pred_check_branch
    %22 = sbr.rel (0) target = $region25
  $region24: #{distilbert_classifier_forward.15} parent=0 // pred_region
    _
  $region25: #{distilbert_classifier_forward.15} parent=0 // pred_fallthru
    _
  %v24 = vld [vmem:[%s0] sm:$0xf]
  %v25 = vld [vmem:[%s0 + $0x4] sm:$0xf]
  %v26 = vld [vmem:[%s1] sm:$0xf]
  %v27 = vld [vmem:[%s1 + $0x4] sm:$0xf]
  %v28 = vld [vmem:[%s1 + $0x8] sm:$0xf]
  %v29 = vld [vmem:[%s1 + $0xc] sm:$0xf]
  %v30 = vld [vmem:[%s1 + $0x10] sm:$0xf]
  %v31 = vld [vmem:[%s1 + $0x14] sm:$0xf]
  %v32 = vld [vmem:[%s1 + $0x18] sm:$0xf]
  %v33 = vld [vmem:[%s1 + $0x1c] sm:$0xf]
  %v34 = vld [vmem:[%s2] sm:$0x1]
  %v36 = vperm.slane %v34, 0
  %v40 = vunpack.c.l.b16 %v24
  %v41 = vunpack.c.l.b16 %v25
  %v42 = vpack.c.b16 %v41, %v40
  %v51 = vunpack.c.l.b16 %v26
  %v52 = vunpack.c.l.b16 %v27
  %v53 = vunpack.c.l.b16 %v28
  %v54 = vunpack.c.l.b16 %v29
  %v55 = vunpack.c.l.b16 %v30
  %v56 = vunpack.c.l.b16 %v31
  %v57 = vunpack.c.l.b16 %v32
  %v58 = vunpack.c.l.b16 %v33
  %v59 = vpack.c.b16 %v52, %v51
  %v60 = vpack.c.b16 %v54, %v53
  %v61 = vpack.c.b16 %v56, %v55
  %v62 = vpack.c.b16 %v58, %v57
  %vm67 = vcmask 523264
  %v69 = vsel %vm67, %v42, 0
  %71 = vmatpush.bf16.msra.mxu0 0
  %72 = vmatpush.bf16.msra.mxu0 0
  %73 = vmatpush.bf16.msra.mxu0 0
  %74 = vmatpush.bf16.msra.mxu0 0
  %75 = vmatpush.bf16.msra.mxu0 %v62
  %76 = vmatpush.bf16.msra.mxu0 %v61
  %77 = vmatpush.bf16.msra.mxu0 %v60
  %78 = vmatpush.bf16.msra.mxu0 %v59
  %79 = vmatmul.bf16.gmra.mxu0 %v69
  %v80 = vpop.f32.mrf.mxu0
  %v81 = vadd.f32 %v36, %v80
  %v82 = vpop.f32.mrf.mxu0
  %v83 = vadd.f32 %v36, %v82
  %84 = vdwg.mxu0
  %v85 = vld [vmem:[%s3] sm:$0xf]
  %v86 = vld [vmem:[%s3 + $0x4] sm:$0xf]
  %v87 = vunpack.c.l.bf16 %v85
  %v88 = vunpack.c.l.bf16 %v86
  %v89 = vadd.f32 %v81, %v87
  %v90 = vadd.f32 %v83, %v88
  %v91 = vsel %vm67, %v89, 0.0
  %92 = vadd.xlane.f32.xlu0 %v91
  %v93 = vpop.xlane.xlu0 %92
  %v94 = vsel %vm67, %v90, 0.0
  %95 = vadd.xlane.f32.xlu0 %v94
  %v96 = vpop.xlane.xlu0 %95
  %v97 = vrcp.pop 64.0
  %v98 = vmul.f32 64.0, %v97
  %v99 = vsub.f32 1.0, %v98
  %v100 = vmul.f32 %v97, %v99
  %v101 = vadd.f32 %v97, %v100
  %vm102 = vweird.f32 %v97
  %v103 = vsel %vm102, %v97, %v101
  %v104 = vmul.f32 %v93, %v103
  %v105 = vmul.f32 %v96, %v103
  %v106 = vsub.f32 %v89, %v104
  %v107 = vsub.f32 %v90, %v105
  %v108 = vmul.f32 %v106, %v106
  %v109 = vmul.f32 %v107, %v107
  %v110 = vsel %vm67, %v108, 0.0
  %111 = vadd.xlane.f32.xlu0 %v110
  %v112 = vpop.xlane.xlu0 %111
  %v113 = vsel %vm67, %v109, 0.0
  %114 = vadd.xlane.f32.xlu0 %v113
  %v115 = vpop.xlane.xlu0 %114
  %v116 = vmul.f32 %v112, %v103
  %v117 = vmul.f32 %v115, %v103
  %v118 = vadd.f32 %v116, 1e-12
  %v119 = vadd.f32 %v117, 1e-12
  %v120 = vrsqrt.pop %v118
  %v121 = vmul.f32 %v120, %v118
  %v122 = vmul.f32 %v121, %v120
  %v123 = vmul.f32 0.5, %v122
  %v124 = vsub.f32 1.5, %v123
  %v125 = vmul.f32 %v120, %v124
  %vm126 = vweird.f32 %v118
  %vm127 = vweird.f32 %v120
  %vm128 = vmor %vm126, %vm127
  %v129 = vsel %vm128, %v120, %v125
  %v130 = vrsqrt.pop %v119
  %v131 = vmul.f32 %v130, %v119
  %v132 = vmul.f32 %v131, %v130
  %v133 = vmul.f32 0.5, %v132
  %v134 = vsub.f32 1.5, %v133
  %v135 = vmul.f32 %v130, %v134
  %vm136 = vweird.f32 %v119
  %vm137 = vweird.f32 %v130
  %vm138 = vmor %vm136, %vm137
  %v139 = vsel %vm138, %v130, %v135
  %v140 = vmul.f32 %v106, %v129
  %v141 = vmul.f32 %v107, %v139
  %v142 = vld [vmem:[%s4] sm:$0x1]
  %v144 = vperm.slane %v142, 0
  %v146 = vmul.f32 %v140, %v144
  %v147 = vmul.f32 %v141, %v144
  %v148 = vld [vmem:[%s5] sm:$0x1]
  %v150 = vperm.slane %v148, 0
  %v152 = vadd.f32 %v146, %v150
  %v153 = vadd.f32 %v147, %v150
  %v154 = vpack.c.bf16 %v152, %v152
  %v155 = vpack.c.bf16 %v153, %v153
  %vm156 = vcmask 519168
  %157 = vst.msk [vmem:[%s6] sm:$0xf] %vm156, %v154
  %158 = vst.msk [vmem:[%s6 + $0x4] sm:$0xf] %vm156, %v155
  // Predicated region
  $region26: #{distilbert_classifier_forward.15} parent=0 // pred_check
    _
  $region27: #{distilbert_classifier_forward.15} parent=0 // pred_check_branch
    %160 = sbr.rel (0) target = $region29
  $region28: #{distilbert_classifier_forward.15} parent=0 // pred_region
    _
  $region29: #{distilbert_classifier_forward.15} parent=0 // pred_fallthru
    _
  // Predicated region
  $region30: #{distilbert_classifier_forward.15} parent=0 // pred_check
    _
  $region31: #{distilbert_classifier_forward.15} parent=0 // pred_check_branch
    %162 = sbr.rel (0) target = $region33
  $region32: #{distilbert_classifier_forward.15} parent=0 // pred_region
    _
  $region33: #{distilbert_classifier_forward.15} parent=0 // pred_fallthru
    _

// kernel: distilbert_classifier_forward.13
$region0: #{distilbert_classifier_forward.13}
  #allocation0 [shape = 'u32[]', space=smem, size = 0x4, offset = 0x4, fixed_abs, tag = 'smem constant byte address 0x4 - core index']
  #allocation1 [shape = 'u32[72,128]{1,0:T(1,128)}', space=vmem, size = 0x9000, scoped, tag = 'internal scratch']
  %s0 = inlined_call_operand.vmem [shape: bf16[16,64], index: 0, kind: input, shape index: {}]
  %s1 = inlined_call_operand.vmem [shape: bf16[64,192], index: 1, kind: input, shape index: {}]
  %s2 = inlined_call_operand.vmem [shape: f32[1,192], index: 2, kind: input, shape index: {}]
  %s3 = inlined_call_operand.vmem [shape: bf16[16,192], index: 3, kind: output, shape index: {}]
  %s4 = sld [smem:[#allocation0]]
  $region22: #{distilbert_classifier_forward.13} parent=0
    _
  %s6 = ssub.s32 1, %s4
  %s7 = scalar_select 0, %s6, %s4
  // Predicated region
  $region2: #{distilbert_classifier_forward.13} parent=0 // pred_check
    _
  $region3: #{distilbert_classifier_forward.13} parent=0 // pred_check_branch
    %9 = sbr.rel (0) target = $region5
  $region4: #{distilbert_classifier_forward.13} parent=0 // pred_region
    _
  $region5: #{distilbert_classifier_forward.13} parent=0 // pred_fallthru
    _
  // Predicated region
  $region6: #{distilbert_classifier_forward.13} parent=0 // pred_check
    _
  $region7: #{distilbert_classifier_forward.13} parent=0 // pred_check_branch
    %11 = sbr.rel (0) target = $region9
  $region8: #{distilbert_classifier_forward.13} parent=0 // pred_region
    _
  $region9: #{distilbert_classifier_forward.13} parent=0 // pred_fallthru
    _
  // Predicated region
  $region10: #{distilbert_classifier_forward.13} parent=0 // pred_check
    _
  $region11: #{distilbert_classifier_forward.13} parent=0 // pred_check_branch
    %13 = sbr.rel (0) target = $region13
  $region12: #{distilbert_classifier_forward.13} parent=0 // pred_region
    _
  $region13: #{distilbert_classifier_forward.13} parent=0 // pred_fallthru
    _
  %v15 = vld [vmem:[%s0] sm:$0xf]
  %v16 = vld [vmem:[%s0 + $0x4] sm:$0xf]
  %v17 = vld [vmem:[%s1] sm:$0xff]
  %v18 = vld [vmem:[%s1 + $0x8] sm:$0xff]
  %v19 = vld [vmem:[%s1 + $0x10] sm:$0xff]
  %v20 = vld [vmem:[%s1 + $0x18] sm:$0xff]
  %v21 = vld [vmem:[%s1 + $0x20] sm:$0xff]
  %v22 = vld [vmem:[%s1 + $0x28] sm:$0xff]
  %v23 = vld [vmem:[%s1 + $0x30] sm:$0xff]
  %v24 = vld [vmem:[%s1 + $0x38] sm:$0xff]
  %v25 = vld [vmem:[%s2] sm:$0x3]
  %v27 = vperm.slane %v25, 0
  %v28 = vperm.slane %v25, 1
  %v33 = vunpack.c.l.b16 %v15
  %v34 = vunpack.c.l.b16 %v16
  %v35 = vpack.c.b16 %v34, %v33
  %v44 = vunpack.c.l.b16 %v17
  %v45 = vunpack.c.h.b16 %v17
  %v46 = vunpack.c.l.b16 %v18
  %v47 = vunpack.c.h.b16 %v18
  %v48 = vunpack.c.l.b16 %v19
  %v49 = vunpack.c.h.b16 %v19
  %v50 = vunpack.c.l.b16 %v20
  %v51 = vunpack.c.h.b16 %v20
  %v52 = vunpack.c.l.b16 %v21
  %v53 = vunpack.c.h.b16 %v21
  %v54 = vunpack.c.l.b16 %v22
  %v55 = vunpack.c.h.b16 %v22
  %v56 = vunpack.c.l.b16 %v23
  %v57 = vunpack.c.h.b16 %v23
  %v58 = vunpack.c.l.b16 %v24
  %v59 = vunpack.c.h.b16 %v24
  %v60 = vpack.c.b16 %v46, %v44
  %v61 = vpack.c.b16 %v47, %v45
  %v62 = vpack.c.b16 %v50, %v48
  %v63 = vpack.c.b16 %v51, %v49
  %v64 = vpack.c.b16 %v54, %v52
  %v65 = vpack.c.b16 %v55, %v53
  %v66 = vpack.c.b16 %v58, %v56
  %v67 = vpack.c.b16 %v59, %v57
  %vm76 = vcmask 523264
  %v78 = vsel %vm76, %v35, 0
  %80 = vmatpush.bf16.msra.mxu0 0
  %81 = vmatpush.bf16.msra.mxu0 0
  %82 = vmatpush.bf16.msra.mxu0 0
  %83 = vmatpush.bf16.msra.mxu0 0
  %84 = vmatpush.bf16.msra.mxu0 %v66
  %85 = vmatpush.bf16.msra.mxu0 %v64
  %86 = vmatpush.bf16.msra.mxu0 %v62
  %87 = vmatpush.bf16.msra.mxu0 %v60
  %88 = vmatmul.bf16.gmra.mxu0 %v78
  %v89 = vpop.f32.mrf.mxu0
  %v90 = vadd.f32 %v27, %v89
  %v91 = vpop.f32.mrf.mxu0
  %v92 = vadd.f32 %v27, %v91
  %93 = vdwg.mxu0
  %94 = vmatpush.bf16.msra.mxu0 0
  %95 = vmatpush.bf16.msra.mxu0 0
  %96 = vmatpush.bf16.msra.mxu0 0
  %97 = vmatpush.bf16.msra.mxu0 0
  %98 = vmatpush.bf16.msra.mxu0 %v67
  %99 = vmatpush.bf16.msra.mxu0 %v65
  %100 = vmatpush.bf16.msra.mxu0 %v63
  %101 = vmatpush.bf16.msra.mxu0 %v61
  %102 = vmatmul.bf16.gmra.mxu0 %v78
  %v103 = vpop.f32.mrf.mxu0
  %v104 = vadd.f32 %v28, %v103
  %v105 = vpop.f32.mrf.mxu0
  %v106 = vadd.f32 %v28, %v105
  %107 = vdwg.mxu0
  %v108 = vpack.c.bf16 %v104, %v90
  %v109 = vpack.c.bf16 %v106, %v92
  %vm110 = vcmask 1043456
  %vm111 = vcmask 523268
  %vm112 = vmor %vm111, %vm110
  %113 = vst.msk [vmem:[%s3] sm:$0xff] %vm112, %v108
  %114 = vst.msk [vmem:[%s3 + $0x8] sm:$0xff] %vm112, %v109
  // Predicated region
  $region14: #{distilbert_classifier_forward.13} parent=0 // pred_check
    _
  $region15: #{distilbert_classifier_forward.13} parent=0 // pred_check_branch
    %116 = sbr.rel (0) target = $region17
  $region16: #{distilbert_classifier_forward.13} parent=0 // pred_region
    _
  $region17: #{distilbert_classifier_forward.13} parent=0 // pred_fallthru
    _
  // Predicated region
  $region18: #{distilbert_classifier_forward.13} parent=0 // pred_check
    _
  $region19: #{distilbert_classifier_forward.13} parent=0 // pred_check_branch
    %118 = sbr.rel (0) target = $region21
  $region20: #{distilbert_classifier_forward.13} parent=0 // pred_region
    _
  $region21: #{distilbert_classifier_forward.13} parent=0 // pred_fallthru
    _

// kernel: distilbert_classifier_forward.14
$region0: #{distilbert_classifier_forward.14}
  #allocation0 [shape = 'u32[]', space=smem, size = 0x4, offset = 0x4, fixed_abs, tag = 'smem constant byte address 0x4 - core index']
  #allocation1 [shape = 'u32[72,128]{1,0:T(1,128)}', space=vmem, size = 0x9000, scoped, tag = 'internal scratch']
  %s0 = inlined_call_operand.vmem [shape: bf16[2,8,192], index: 0, kind: input, shape index: {}]
  %s1 = inlined_call_operand.vmem [shape: f32[2,1,8], index: 1, kind: input, shape index: {}]
  %s2 = inlined_call_operand.vmem [shape: bf16[2,8,64], index: 2, kind: output, shape index: {}]
  %s3 = sld [smem:[#allocation0]]
  $region41: #{distilbert_classifier_forward.14} parent=0
    _
  %s5 = ssub.s32 1, %s3
  %s6 = scalar_select 0, %s5, %s3
  loop: start=0, step=1, limit=4
  $region2: #{distilbert_classifier_forward.14} parent=0 // loop_pre_header
    _
  $region3: #{distilbert_classifier_forward.14} parent=0 // loop_header
    %s8 = sphi 0, %s12
    %p9 = scmp.ge.s32.totalorder %s8, 4
    %s18 = sphi 0, %s20
    %s21 = sphi 0, %s18
    %s22 = sphi 0, %s21
    %s38 = sphi 0, %s22
    %s44 = sphi 0, %s46
    %s47 = sphi 0, %s44
    %s48 = sphi 0, %s47
    %s64 = sphi 0, %s48
    %s70 = sphi 0, %s72
    %s73 = sphi 0, %s70
    %s74 = sphi 0, %s73
    %s90 = sphi 0, %s74
  $region4: #{distilbert_classifier_forward.14} parent=0 // loop_header_branch
    %11 = sbr.rel (%p9) target = $region8
  $region5: #{distilbert_classifier_forward.14} parent=0 // loop_body
    %s13 = ssub.s32 %s8, 1
    %s14 = ssub.s32 %s8, 2
    %s15 = sadd.s32 %s8, 1
    %s16 = ssub.s32 %s8, %s15
    %p17 = scmp.eq.s32.totalorder %s16, 0
    %s19 = sadd.s32 %s18, 1
    %s20 = scalar_select %p17, %s18, %s19
    %p23 = pneg %p17
    %p24 = scmp.eq.s32.totalorder %s8, 1
    %p25 = por %p23, %p24
    %p26 = scmp.ne.s32.totalorder %s18, %s21
    %p27 = scmp.eq.s32.totalorder %s8, 0
    %p28 = por %p26, %p27
    %p29 = scmp.ne.s32.totalorder %s18, %s21
    %p30 = scmp.eq.s32.totalorder %s13, 1
    %p31 = por %p29, %p30
    %p32 = scmp.ne.s32.totalorder %s21, %s22
    %p33 = scmp.eq.s32.totalorder %s13, 0
    %p34 = por %p32, %p33
    %p35 = scmp.ne.s32.totalorder %s21, %s22
    %p36 = scmp.eq.s32.totalorder %s14, 1
    %p37 = por %p35, %p36
    %p39 = scmp.ne.s32.totalorder %s22, %s38
    %p40 = scmp.eq.s32.totalorder %s14, 0
    %p41 = por %p39, %p40
    %s42 = ssub.s32 %s8, %s15
    %p43 = scmp.eq.s32.totalorder %s42, 0
    %s45 = sadd.s32 %s44, 1
    %s46 = scalar_select %p43, %s44, %s45
    %p49 = pneg %p43
    %p50 = scmp.eq.s32.totalorder %s8, 1
    %p51 = por %p49, %p50
    %p52 = scmp.ne.s32.totalorder %s44, %s47
    %p53 = scmp.eq.s32.totalorder %s8, 0
    %p54 = por %p52, %p53
    %p55 = scmp.ne.s32.totalorder %s44, %s47
    %p56 = scmp.eq.s32.totalorder %s13, 1
    %p57 = por %p55, %p56
    %p58 = scmp.ne.s32.totalorder %s47, %s48
    %p59 = scmp.eq.s32.totalorder %s13, 0
    %p60 = por %p58, %p59
    %p61 = scmp.ne.s32.totalorder %s47, %s48
    %p62 = scmp.eq.s32.totalorder %s14, 1
    %p63 = por %p61, %p62
    %p65 = scmp.ne.s32.totalorder %s48, %s64
    %p66 = scmp.eq.s32.totalorder %s14, 0
    %p67 = por %p65, %p66
    %s68 = ssub.s32 %s8, %s15
    %p69 = scmp.eq.s32.totalorder %s68, 0
    %s71 = sadd.s32 %s70, 1
    %s72 = scalar_select %p69, %s70, %s71
    %p75 = pneg %p69
    %p76 = scmp.eq.s32.totalorder %s8, 1
    %p77 = por %p75, %p76
    %p78 = scmp.ne.s32.totalorder %s70, %s73
    %p79 = scmp.eq.s32.totalorder %s8, 0
    %p80 = por %p78, %p79
    %p81 = scmp.ne.s32.totalorder %s70, %s73
    %p82 = scmp.eq.s32.totalorder %s13, 1
    %p83 = por %p81, %p82
    %p84 = scmp.ne.s32.totalorder %s73, %s74
    %p85 = scmp.eq.s32.totalorder %s13, 0
    %p86 = por %p84, %p85
    %p87 = scmp.ne.s32.totalorder %s73, %s74
    %p88 = scmp.eq.s32.totalorder %s14, 1
    %p89 = por %p87, %p88
    %p91 = scmp.ne.s32.totalorder %s74, %s90
    %p92 = scmp.eq.s32.totalorder %s14, 0
    %p93 = por %p91, %p92
    %p94 = scmp.le.s32.totalorder 1, %s8
    %p95 = scmp.lt.s32.totalorder %s8, 3
    %p96 = pnand %p94, %p95
    %p97 = pneg %p96
    // Predicated region
    $region9: #{distilbert_classifier_forward.14} parent=5 // pred_check
      _
    $region10: #{distilbert_classifier_forward.14} parent=5 // pred_check_branch
      %99 = sbr.rel (%p96) target = $region12
    $region11: #{distilbert_classifier_forward.14} parent=5 // pred_region
      %s100 = ssub.s32 %s8, 1
    $region12: #{distilbert_classifier_forward.14} parent=5 // pred_fallthru
      _
    %p101 = scmp.lt.s32.totalorder %s8, 2
    // Predicated region
    $region13: #{distilbert_classifier_forward.14} parent=5 // pred_check
      %p102 = pneg %p101
    $region14: #{distilbert_classifier_forward.14} parent=5 // pred_check_branch
      %104 = sbr.rel (%p102) target = $region16
    $region15: #{distilbert_classifier_forward.14} parent=5 // pred_region
      // Predicated region
      $region17: #{distilbert_classifier_forward.14} parent=15 // pred_check
        %p105 = pneg %p28
      $region18: #{distilbert_classifier_forward.14} parent=15 // pred_check_branch
        %107 = sbr.rel (%p105) target = $region20
      $region19: #{distilbert_classifier_forward.14} parent=15 // pred_region
        %p108 = scmp.lt.s32.totalorder %s8, 1
        %s109 = scalar_select %p108, %s8, 1
        %s110 = smul.addr %s109, 2
        %s111 = smul.addr %s110, 4
        %s112 = scalar_lea.vmem %s0, %s111
      $region20: #{distilbert_classifier_forward.14} parent=15 // pred_fallthru
        _
      // Predicated region
      $region21: #{distilbert_classifier_forward.14} parent=15 // pred_check
        %p113 = pneg %p54
      $region22: #{distilbert_classifier_forward.14} parent=15 // pred_check_branch
        %115 = sbr.rel (%p113) target = $region24
      $region23: #{distilbert_classifier_forward.14} parent=15 // pred_region
        %p116 = scmp.lt.s32.totalorder %s8, 1
        %s117 = scalar_select %p116, %s8, 1
        %s118 = scalar_lea.vmem %s1, %s117
      $region24: #{distilbert_classifier_forward.14} parent=15 // pred_fallthru
        _
    $region16: #{distilbert_classifier_forward.14} parent=5 // pred_fallthru
      _
    %p119 = scmp.le.s32.totalorder 1, %s8
    %p120 = scmp.lt.s32.totalorder %s8, 3
    %p121 = pnand %p119, %p120
    %p122 = pneg %p121
    // Predicated region
    $region25: #{distilbert_classifier_forward.14} parent=5 // pred_check
      _
    $region26: #{distilbert_classifier_forward.14} parent=5 // pred_check_branch
      %124 = sbr.rel (%p121) target = $region28
    $region27: #{distilbert_classifier_forward.14} parent=5 // pred_region
      %s125 = ssub.s32 %s8, 1
      %p126 = scmp.lt.s32.totalorder %s13, 1
      %s127 = scalar_select %p126, %s13, 1
      %s128 = smul.addr %s127, 2
      %s129 = smul.addr %s128, 4
      %s130 = scalar_lea.vmem %s0, %s129
      %p131 = pneg %p34
      %p132 = pneg %p31
      %p133 = scmp.lt.s32.totalorder %s13, 1
      %s134 = scalar_select %p133, %s13, 1
      %s135 = scalar_lea.vmem %s1, %s134
      %p136 = pneg %p60
      %p137 = pneg %p57
      %p138 = pneg %p86
      %p139 = pneg %p83
      %p140 = scmp.lt.s32.totalorder %s13, 1
      %s141 = scalar_select %p140, %s13, 1
      %s142 = smul.addr %s141, 4
      %s143 = scalar_lea.vmem %s2, %s142
      %p144 = scmp.lt.s32.totalorder %s13, 1
      %s145 = scalar_select %p144, %s13, 1
      %s146 = smul.addr %s145, 2
      %s147 = smul.addr %s146, 4
      %s148 = scalar_lea.vmem %s0, %s147
      %p149 = scmp.lt.s32.totalorder %s13, 1
      %s150 = scalar_select %p149, %s13, 1
      %s151 = scalar_lea.vmem %s1, %s150
      %p152 = scmp.lt.s32.totalorder %s13, 1
      %s153 = scalar_select %p152, %s13, 1
      %s154 = smul.addr %s153, 4
      %s155 = scalar_lea.vmem %s2, %s154
      %v157 = vld [vmem:[%s151] sm:$0x1]
      %v158 = vld [vmem:[%s148] sm:$0xf]
      %v159 = vld [vmem:[%s148 + $0x4] sm:$0xf]
      %v161 = vperm.slane %v157, 0
      %v164 = vunpack.c.l.b16 %v158
      %v165 = vpack.c.b16 %v164, %v164
      %166 = vrot.lane.b32.xlu0 %v165, 64
      %v167 = vpop.permute.xlu0 %166
      %vm168 = vcmask 130048
      %v170 = vsel %vm168, %v158, 0
      %v173 = vsel %vm168, %v167, 0
      %175 = vmatpush.bf16.xpose.msra.mxu0 0
      %176 = vmatpush.bf16.xpose.msra.mxu0 0
      %177 = vmatpush.bf16.xpose.msra.mxu0 0
      %178 = vmatpush.bf16.xpose.msra.mxu0 0
      %179 = vmatpush.bf16.xpose.msra.mxu0 0
      %180 = vmatpush.bf16.xpose.msra.mxu0 0
      %181 = vmatpush.bf16.xpose.msra.mxu0 0
      %182 = vmatpush.bf16.xpose.msra.mxu0 %v173
      %183 = vmatmul.bf16.gmra.mxu0 %v170
      %v184 = vpop.f32.mrf.mxu0
      %v185 = vadd.f32 %v161, %v184
      %v186 = vpop.f32.mrf.mxu0
      %187 = vdwg.mxu0
      %vm188 = vcmask 64512
      %v189 = vsel %vm188, %v185, -inf
      %190 = vmax.xlane.f32.xlu0 %v189
      %v191 = vpop.xlane.xlu0 %190
      %v192 = vsub.f32 %v185, %v191
      %v193 = vmul.f32 %v192, 1.442695
      %v194 = vpow.pop %v193
      %v195 = vsel %vm188, %v194, 0.0
      %196 = vadd.xlane.f32.xlu0 %v195
      %v197 = vpop.xlane.xlu0 %196
      %v198 = vpack.c.bf16 %v194, %v194
      %v200 = vsel %vm188, %v198, 0
      %vm202 = vcmask 1043456
      %v204 = vsel %vm202, %v159, 0
      %206 = vmatpush.bf16.msra.mxu0 0
      %207 = vmatpush.bf16.msra.mxu0 0
      %208 = vmatpush.bf16.msra.mxu0 0
      %209 = vmatpush.bf16.msra.mxu0 0
      %210 = vmatpush.bf16.msra.mxu0 0
      %211 = vmatpush.bf16.msra.mxu0 0
      %212 = vmatpush.bf16.msra.mxu0 0
      %213 = vmatpush.bf16.msra.mxu0 %v204
      %214 = vmatmul.bf16.gmra.mxu0 %v200
      %v215 = vpop.f32.mrf.mxu0
      %v216 = vadd.f32 0.0, %v215
      %v217 = vpop.f32.mrf.mxu0
      %218 = vdwg.mxu0
      %v219 = vrcp.pop %v197
      %v220 = vmul.f32 %v216, %v219
      %221 = vrot.lane.b32.xlu0 %v165, 112
      %v222 = vpop.permute.xlu0 %221
      %223 = vrot.lane.b32.xlu0 %v165, 48
      %v224 = vpop.permute.xlu0 %223
      %v226 = vsel %vm168, %v222, 0
      %v229 = vsel %vm168, %v224, 0
      %231 = vmatpush.bf16.xpose.msra.mxu0 0
      %232 = vmatpush.bf16.xpose.msra.mxu0 0
      %233 = vmatpush.bf16.xpose.msra.mxu0 0
      %234 = vmatpush.bf16.xpose.msra.mxu0 0
      %235 = vmatpush.bf16.xpose.msra.mxu0 0
      %236 = vmatpush.bf16.xpose.msra.mxu0 0
      %237 = vmatpush.bf16.xpose.msra.mxu0 0
      %238 = vmatpush.bf16.xpose.msra.mxu0 %v229
      %239 = vmatmul.bf16.gmra.mxu0 %v226
      %v240 = vpop.f32.mrf.mxu0
      %v241 = vadd.f32 %v161, %v240
      %v242 = vpop.f32.mrf.mxu0
      %243 = vdwg.mxu0
      %v244 = vsel %vm188, %v241, -inf
      %245 = vmax.xlane.f32.xlu0 %v244
      %v246 = vpop.xlane.xlu0 %245
      %v247 = vsub.f32 %v241, %v246
      %v248 = vmul.f32 %v247, 1.442695
      %v249 = vpow.pop %v248
      %v250 = vsel %vm188, %v249, 0.0
      %251 = vadd.xlane.f32.xlu0 %v250
      %v252 = vpop.xlane.xlu0 %251
      %v253 = vpack.c.bf16 %v249, %v249
      %v255 = vunpack.c.l.b16 %v159
      %v256 = vpack.c.b16 %v255, %v255
      %257 = vrot.lane.b32.xlu0 %v256, 112
      %v258 = vpop.permute.xlu0 %257
      %v260 = vsel %vm188, %v253, 0
      %v263 = vsel %vm202, %v258, 0
      %265 = vmatpush.bf16.msra.mxu0 0
      %266 = vmatpush.bf16.msra.mxu0 0
      %267 = vmatpush.bf16.msra.mxu0 0
      %268 = vmatpush.bf16.msra.mxu0 0
      %269 = vmatpush.bf16.msra.mxu0 0
      %270 = vmatpush.bf16.msra.mxu0 0
      %271 = vmatpush.bf16.msra.mxu0 0
      %272 = vmatpush.bf16.msra.mxu0 %v263
      %273 = vmatmul.bf16.gmra.mxu0 %v260
      %v274 = vpop.f32.mrf.mxu0
      %v275 = vadd.f32 0.0, %v274
      %v276 = vpop.f32.mrf.mxu0
      %277 = vdwg.mxu0
      %v278 = vrcp.pop %v252
      %v279 = vmul.f32 %v275, %v278
      %280 = vrot.lane.b32.xlu0 %v165, 96
      %v281 = vpop.permute.xlu0 %280
      %282 = vrot.lane.b32.xlu0 %v165, 32
      %v283 = vpop.permute.xlu0 %282
      %v285 = vsel %vm168, %v281, 0
      %v288 = vsel %vm168, %v283, 0
      %290 = vmatpush.bf16.xpose.msra.mxu0 0
      %291 = vmatpush.bf16.xpose.msra.mxu0 0
      %292 = vmatpush.bf16.xpose.msra.mxu0 0
      %293 = vmatpush.bf16.xpose.msra.mxu0 0
      %294 = vmatpush.bf16.xpose.msra.mxu0 0
      %295 = vmatpush.bf16.xpose.msra.mxu0 0
      %296 = vmatpush.bf16.xpose.msra.mxu0 0
      %297 = vmatpush.bf16.xpose.msra.mxu0 %v288
      %298 = vmatmul.bf16.gmra.mxu0 %v285
      %v299 = vpop.f32.mrf.mxu0
      %v300 = vadd.f32 %v161, %v299
      %v301 = vpop.f32.mrf.mxu0
      %302 = vdwg.mxu0
      %v303 = vsel %vm188, %v300, -inf
      %304 = vmax.xlane.f32.xlu0 %v303
      %v305 = vpop.xlane.xlu0 %304
      %v306 = vsub.f32 %v300, %v305
      %v307 = vmul.f32 %v306, 1.442695
      %v308 = vpow.pop %v307
      %v309 = vsel %vm188, %v308, 0.0
      %310 = vadd.xlane.f32.xlu0 %v309
      %v311 = vpop.xlane.xlu0 %310
      %v312 = vpack.c.bf16 %v308, %v308
      %313 = vrot.lane.b32.xlu0 %v256, 96
      %v314 = vpop.permute.xlu0 %313
      %v316 = vsel %vm188, %v312, 0
      %v319 = vsel %vm202, %v314, 0
      %321 = vmatpush.bf16.msra.mxu0 0
      %322 = vmatpush.bf16.msra.mxu0 0
      %323 = vmatpush.bf16.msra.mxu0 0
      %324 = vmatpush.bf16.msra.mxu0 0
      %325 = vmatpush.bf16.msra.mxu0 0
      %326 = vmatpush.bf16.msra.mxu0 0
      %327 = vmatpush.bf16.msra.mxu0 0
      %328 = vmatpush.bf16.msra.mxu0 %v319
      %329 = vmatmul.bf16.gmra.mxu0 %v316
      %v330 = vpop.f32.mrf.mxu0
      %v331 = vadd.f32 0.0, %v330
      %v332 = vpop.f32.mrf.mxu0
      %333 = vdwg.mxu0
      %v334 = vrcp.pop %v311
      %v335 = vmul.f32 %v331, %v334
      %336 = vrot.lane.b32.xlu0 %v165, 80
      %v337 = vpop.permute.xlu0 %336
      %338 = vrot.lane.b32.xlu0 %v165, 16
      %v339 = vpop.permute.xlu0 %338
      %v341 = vsel %vm168, %v337, 0
      %v344 = vsel %vm168, %v339, 0
      %346 = vmatpush.bf16.xpose.msra.mxu0 0
      %347 = vmatpush.bf16.xpose.msra.mxu0 0
      %348 = vmatpush.bf16.xpose.msra.mxu0 0
      %349 = vmatpush.bf16.xpose.msra.mxu0 0
      %350 = vmatpush.bf16.xpose.msra.mxu0 0
      %351 = vmatpush.bf16.xpose.msra.mxu0 0
      %352 = vmatpush.bf16.xpose.msra.mxu0 0
      %353 = vmatpush.bf16.xpose.msra.mxu0 %v344
      %354 = vmatmul.bf16.gmra.mxu0 %v341
      %v355 = vpop.f32.mrf.mxu0
      %v356 = vadd.f32 %v161, %v355
      %v357 = vpop.f32.mrf.mxu0
      %358 = vdwg.mxu0
      %v359 = vsel %vm188, %v356, -inf
      %360 = vmax.xlane.f32.xlu0 %v359
      %v361 = vpop.xlane.xlu0 %360
      %v362 = vsub.f32 %v356, %v361
      %v363 = vmul.f32 %v362, 1.442695
      %v364 = vpow.pop %v363
      %v365 = vsel %vm188, %v364, 0.0
      %366 = vadd.xlane.f32.xlu0 %v365
      %v367 = vpop.xlane.xlu0 %366
      %v368 = vpack.c.bf16 %v364, %v364
      %369 = vrot.lane.b32.xlu0 %v256, 80
      %v370 = vpop.permute.xlu0 %369
      %v372 = vsel %vm188, %v368, 0
      %v375 = vsel %vm202, %v370, 0
      %377 = vmatpush.bf16.msra.mxu0 0
      %378 = vmatpush.bf16.msra.mxu0 0
      %379 = vmatpush.bf16.msra.mxu0 0
      %380 = vmatpush.bf16.msra.mxu0 0
      %381 = vmatpush.bf16.msra.mxu0 0
      %382 = vmatpush.bf16.msra.mxu0 0
      %383 = vmatpush.bf16.msra.mxu0 0
      %384 = vmatpush.bf16.msra.mxu0 %v375
      %385 = vmatmul.bf16.gmra.mxu0 %v372
      %v386 = vpop.f32.mrf.mxu0
      %v387 = vadd.f32 0.0, %v386
      %v388 = vpop.f32.mrf.mxu0
      %389 = vdwg.mxu0
      %v390 = vrcp.pop %v367
      %v391 = vmul.f32 %v387, %v390
      %393 = vrot.lane.b32.xlu0 %v279, 16
      %v394 = vpop.permute.xlu0 %393
      %397 = vrot.lane.b32.xlu0 %v335, 32
      %v398 = vpop.permute.xlu0 %397
      %401 = vrot.lane.b32.xlu0 %v391, 48
      %v402 = vpop.permute.xlu0 %401
      %v404 = vsel %vm168, %v220, %v394
      %vm405 = vcmask 261120
      %v406 = vsel %vm405, %v404, %v398
      %vm407 = vcmask 392192
      %v408 = vsel %vm407, %v406, %v402
      %v409 = vpack.c.bf16 %v408, %v408
      %vm410 = vcmask 519168
      %411 = vst.msk [vmem:[%s155] sm:$0xf] %vm410, %v409
      %p412 = scmp.lt.s32.totalorder %s13, 1
      %s413 = scalar_select %p412, %s13, 1
      %s414 = smul.addr %s413, 4
      %s415 = scalar_lea.vmem %s2, %s414
      // Predicated region
      $region29: #{distilbert_classifier_forward.14} parent=27 // pred_check
        %p416 = pneg %p83
      $region30: #{distilbert_classifier_forward.14} parent=27 // pred_check_branch
        %418 = sbr.rel (%p416) target = $region32
      $region31: #{distilbert_classifier_forward.14} parent=27 // pred_region
        _
      $region32: #{distilbert_classifier_forward.14} parent=27 // pred_fallthru
        _
    $region28: #{distilbert_classifier_forward.14} parent=5 // pred_fallthru
      _
    %p419 = scmp.le.s32.totalorder 2, %s8
    // Predicated region
    $region33: #{distilbert_classifier_forward.14} parent=5 // pred_check
      %p420 = pneg %p419
    $region34: #{distilbert_classifier_forward.14} parent=5 // pred_check_branch
      %422 = sbr.rel (%p420) target = $region36
    $region35: #{distilbert_classifier_forward.14} parent=5 // pred_region
      %s423 = ssub.s32 %s8, 2
      // Predicated region
      $region37: #{distilbert_classifier_forward.14} parent=35 // pred_check
        %p424 = pneg %p89
      $region38: #{distilbert_classifier_forward.14} parent=35 // pred_check_branch
        %426 = sbr.rel (%p424) target = $region40
      $region39: #{distilbert_classifier_forward.14} parent=35 // pred_region
        %p427 = scmp.lt.s32.totalorder %s14, 1
        %s428 = scalar_select %p427, %s14, 1
        %s429 = smul.addr %s428, 4
        %s430 = scalar_lea.vmem %s2, %s429
      $region40: #{distilbert_classifier_forward.14} parent=35 // pred_fallthru
        _
    $region36: #{distilbert_classifier_forward.14} parent=5 // pred_fallthru
      _
  $region6: #{distilbert_classifier_forward.14} parent=0 // loop_footer
    %s12 = sadd.s32 1, %s8
  $region7: #{distilbert_classifier_forward.14} parent=0 // loop_footer_branch
    %7 = sbr.rel target = $region3
  $region8: #{distilbert_classifier_forward.14} parent=0 // loop_exit
    _

// kernel: distilbert_classifier_forward.16
$region0: #{distilbert_classifier_forward.16}
  #allocation0 [shape = 'u32[]', space=smem, size = 0x4, offset = 0x4, fixed_abs, tag = 'smem constant byte address 0x4 - core index']
  #allocation1 [shape = 'u32[72,128]{1,0:T(1,128)}', space=vmem, size = 0x9000, scoped, tag = 'internal scratch']
  %s0 = inlined_call_operand.vmem [shape: bf16[16,64], index: 0, kind: input, shape index: {}]
  %s1 = inlined_call_operand.vmem [shape: bf16[64,128], index: 1, kind: input, shape index: {}]
  %s2 = inlined_call_operand.vmem [shape: f32[1,128], index: 2, kind: input, shape index: {}]
  %s3 = inlined_call_operand.vmem [shape: bf16[16,128], index: 3, kind: output, shape index: {}]
  %s4 = sld [smem:[#allocation0]]
  $region22: #{distilbert_classifier_forward.16} parent=0
    _
  %s6 = ssub.s32 1, %s4
  %s7 = scalar_select 0, %s6, %s4
  // Predicated region
  $region2: #{distilbert_classifier_forward.16} parent=0 // pred_check
    _
  $region3: #{distilbert_classifier_forward.16} parent=0 // pred_check_branch
    %9 = sbr.rel (0) target = $region5
  $region4: #{distilbert_classifier_forward.16} parent=0 // pred_region
    _
  $region5: #{distilbert_classifier_forward.16} parent=0 // pred_fallthru
    _
  // Predicated region
  $region6: #{distilbert_classifier_forward.16} parent=0 // pred_check
    _
  $region7: #{distilbert_classifier_forward.16} parent=0 // pred_check_branch
    %11 = sbr.rel (0) target = $region9
  $region8: #{distilbert_classifier_forward.16} parent=0 // pred_region
    _
  $region9: #{distilbert_classifier_forward.16} parent=0 // pred_fallthru
    _
  // Predicated region
  $region10: #{distilbert_classifier_forward.16} parent=0 // pred_check
    _
  $region11: #{distilbert_classifier_forward.16} parent=0 // pred_check_branch
    %13 = sbr.rel (0) target = $region13
  $region12: #{distilbert_classifier_forward.16} parent=0 // pred_region
    _
  $region13: #{distilbert_classifier_forward.16} parent=0 // pred_fallthru
    _
  %v15 = vld [vmem:[%s0] sm:$0xf]
  %v16 = vld [vmem:[%s0 + $0x4] sm:$0xf]
  %v17 = vld [vmem:[%s1] sm:$0xf]
  %v18 = vld [vmem:[%s1 + $0x4] sm:$0xf]
  %v19 = vld [vmem:[%s1 + $0x8] sm:$0xf]
  %v20 = vld [vmem:[%s1 + $0xc] sm:$0xf]
  %v21 = vld [vmem:[%s1 + $0x10] sm:$0xf]
  %v22 = vld [vmem:[%s1 + $0x14] sm:$0xf]
  %v23 = vld [vmem:[%s1 + $0x18] sm:$0xf]
  %v24 = vld [vmem:[%s1 + $0x1c] sm:$0xf]
  %v25 = vld [vmem:[%s2] sm:$0x1]
  %v27 = vperm.slane %v25, 0
  %v31 = vunpack.c.l.b16 %v15
  %v32 = vunpack.c.l.b16 %v16
  %v33 = vpack.c.b16 %v32, %v31
  %v42 = vunpack.c.l.b16 %v17
  %v43 = vunpack.c.l.b16 %v18
  %v44 = vunpack.c.l.b16 %v19
  %v45 = vunpack.c.l.b16 %v20
  %v46 = vunpack.c.l.b16 %v21
  %v47 = vunpack.c.l.b16 %v22
  %v48 = vunpack.c.l.b16 %v23
  %v49 = vunpack.c.l.b16 %v24
  %v50 = vpack.c.b16 %v43, %v42
  %v51 = vpack.c.b16 %v45, %v44
  %v52 = vpack.c.b16 %v47, %v46
  %v53 = vpack.c.b16 %v49, %v48
  %vm58 = vcmask 523264
  %v60 = vsel %vm58, %v33, 0
  %62 = vmatpush.bf16.msra.mxu0 0
  %63 = vmatpush.bf16.msra.mxu0 0
  %64 = vmatpush.bf16.msra.mxu0 0
  %65 = vmatpush.bf16.msra.mxu0 0
  %66 = vmatpush.bf16.msra.mxu0 %v53
  %67 = vmatpush.bf16.msra.mxu0 %v52
  %68 = vmatpush.bf16.msra.mxu0 %v51
  %69 = vmatpush.bf16.msra.mxu0 %v50
  %70 = vmatmul.bf16.gmra.mxu0 %v60
  %v71 = vpop.f32.mrf.mxu0
  %v72 = vadd.f32 %v27, %v71
  %v73 = vpop.f32.mrf.mxu0
  %v74 = vadd.f32 %v27, %v73
  %75 = vdwg.mxu0
  %v76 = vmul.f32 %v72, 0.5
  %v77 = vmul.f32 %v74, 0.5
  %v78 = vmul.f32 %v72, 0.044715
  %v79 = vmul.f32 %v74, 0.044715
  %v80 = vmul.f32 %v78, %v72
  %v81 = vmul.f32 %v79, %v74
  %v82 = vmul.f32 %v80, %v72
  %v83 = vmul.f32 %v81, %v74
  %v84 = vadd.f32 %v72, %v82
  %v85 = vadd.f32 %v74, %v83
  %v86 = vmul.f32 %v84, 0.7978846
  %v87 = vmul.f32 %v85, 0.7978846
  %v88 = vtanh.pop %v86
  %v89 = vtanh.pop %v87
  %v90 = vadd.f32 %v88, 1.0
  %v91 = vadd.f32 %v89, 1.0
  %v92 = vmul.f32 %v76, %v90
  %v93 = vmul.f32 %v77, %v91
  %v94 = vpack.c.bf16 %v92, %v92
  %v95 = vpack.c.bf16 %v93, %v93
  %96 = vst [vmem:[%s3] sm:$0xf] %v94
  %97 = vst [vmem:[%s3 + $0x4] sm:$0xf] %v95
  // Predicated region
  $region14: #{distilbert_classifier_forward.16} parent=0 // pred_check
    _
  $region15: #{distilbert_classifier_forward.16} parent=0 // pred_check_branch
    %99 = sbr.rel (0) target = $region17
  $region16: #{distilbert_classifier_forward.16} parent=0 // pred_region
    _
  $region17: #{distilbert_classifier_forward.16} parent=0 // pred_fallthru
    _
  // Predicated region
  $region18: #{distilbert_classifier_forward.16} parent=0 // pred_check
    _
  $region19: #{distilbert_classifier_forward.16} parent=0 // pred_check_branch
    %101 = sbr.rel (0) target = $region21
  $region20: #{distilbert_classifier_forward.16} parent=0 // pred_region
    _
  $region21: #{distilbert_classifier_forward.16} parent=0 // pred_fallthru
    _

// kernel: distilbert_classifier_forward.21
$region0: #{distilbert_classifier_forward.21}
  #allocation0 [shape = 'u32[]', space=smem, size = 0x4, offset = 0x4, fixed_abs, tag = 'smem constant byte address 0x4 - core index']
  #allocation1 [shape = 'u32[72,128]{1,0:T(1,128)}', space=vmem, size = 0x9000, scoped, tag = 'internal scratch']
  %s0 = inlined_call_operand.vmem [shape: bf16[16,64], index: 0, kind: input, shape index: {}]
  %s1 = inlined_call_operand.hbm [shape: bf16[64,128], index: 1, kind: input, shape index: {}]
  %s2 = inlined_call_operand.vmem [shape: f32[1,128], index: 2, kind: input, shape index: {}]
  %s3 = inlined_call_operand.vmem [shape: bf16[16,128], index: 3, kind: output, shape index: {}]
  %s4 = sld [smem:[#allocation0]]
  $region26: #{distilbert_classifier_forward.21} parent=0
    _
  %s6 = ssub.s32 1, %s4
  %s7 = scalar_select 0, %s6, %s4
  $region1: #{distilbert_classifier_forward.21} parent=0
    #allocation2 [shape = 'u8[16384]{0}', space=vmem, size = 0x4000, scoped, tag = 'input window, operand 1, single buffered']
    #allocation3 [shape = 's32[1]{0}', space=sflag, size = 0x4, scoped, tag = 'scoped memory for distilbert_classifier_forward.21']
    %8 = vsyncpa [#allocation3], 0
    // Predicated region
    $region2: #{distilbert_classifier_forward.21} parent=1 // pred_check
      _
    $region3: #{distilbert_classifier_forward.21} parent=1 // pred_check_branch
      %10 = sbr.rel (0) target = $region5
    $region4: #{distilbert_classifier_forward.21} parent=1 // pred_region
      _
    $region5: #{distilbert_classifier_forward.21} parent=1 // pred_fallthru
      _
    // Predicated region
    $region6: #{distilbert_classifier_forward.21} parent=1 // pred_check
      _
    $region7: #{distilbert_classifier_forward.21} parent=1 // pred_check_branch
      %12 = sbr.rel (0) target = $region9
    $region8: #{distilbert_classifier_forward.21} parent=1 // pred_region
      %14 = vsyncadd [#allocation3], 0
      %s15 = sshll.u32 %s1, 4
      %s16 = int_to_ptr.hbm [resolvable:$true] %s15
      %s17 = sshll.u32 [#allocation2], 4
      %s18 = int_to_ptr.vmem [resolvable:$true] %s17
      %23 = dma.hbm_to_vmem [thread:$0]  %s16, 512, %s18, [#allocation3], 64, 64, 4
    $region9: #{distilbert_classifier_forward.21} parent=1 // pred_fallthru
      _
    // Predicated region
    $region10: #{distilbert_classifier_forward.21} parent=1 // pred_check
      _
    $region11: #{distilbert_classifier_forward.21} parent=1 // pred_check_branch
      %25 = sbr.rel (0) target = $region13
    $region12: #{distilbert_classifier_forward.21} parent=1 // pred_region
      _
    $region13: #{distilbert_classifier_forward.21} parent=1 // pred_fallthru
      _
    // Predicated region
    $region14: #{distilbert_classifier_forward.21} parent=1 // pred_check
      _
    $region15: #{distilbert_classifier_forward.21} parent=1 // pred_check_branch
      %27 = sbr.rel (0) target = $region17
    $region16: #{distilbert_classifier_forward.21} parent=1 // pred_region
      %29 = dma.done [#allocation3], 512
    $region17: #{distilbert_classifier_forward.21} parent=1 // pred_fallthru
      _
    %v31 = vld [vmem:[%s0] sm:$0xf]
    %v32 = vld [vmem:[%s0 + $0x4] sm:$0xf]
    %v33 = vld [vmem:[#allocation2] sm:$0xf]
    %v34 = vld [vmem:[#allocation2 + $0x4] sm:$0xf]
    %v35 = vld [vmem:[#allocation2 + $0x8] sm:$0xf]
    %v36 = vld [vmem:[#allocation2 + $0xc] sm:$0xf]
    %v37 = vld [vmem:[#allocation2 + $0x10] sm:$0xf]
    %v38 = vld [vmem:[#allocation2 + $0x14] sm:$0xf]
    %v39 = vld [vmem:[#allocation2 + $0x18] sm:$0xf]
    %v40 = vld [vmem:[#allocation2 + $0x1c] sm:$0xf]
    %v41 = vld [vmem:[%s2] sm:$0x1]
    %v43 = vperm.slane %v41, 0
    %v47 = vunpack.c.l.b16 %v31
    %v48 = vunpack.c.l.b16 %v32
    %v49 = vpack.c.b16 %v48, %v47
    %v58 = vunpack.c.l.b16 %v33
    %v59 = vunpack.c.l.b16 %v34
    %v60 = vunpack.c.l.b16 %v35
    %v61 = vunpack.c.l.b16 %v36
    %v62 = vunpack.c.l.b16 %v37
    %v63 = vunpack.c.l.b16 %v38
    %v64 = vunpack.c.l.b16 %v39
    %v65 = vunpack.c.l.b16 %v40
    %v66 = vpack.c.b16 %v59, %v58
    %v67 = vpack.c.b16 %v61, %v60
    %v68 = vpack.c.b16 %v63, %v62
    %v69 = vpack.c.b16 %v65, %v64
    %vm74 = vcmask 523264
    %v76 = vsel %vm74, %v49, 0
    %78 = vmatpush.bf16.msra.mxu0 0
    %79 = vmatpush.bf16.msra.mxu0 0
    %80 = vmatpush.bf16.msra.mxu0 0
    %81 = vmatpush.bf16.msra.mxu0 0
    %82 = vmatpush.bf16.msra.mxu0 %v69
    %83 = vmatpush.bf16.msra.mxu0 %v68
    %84 = vmatpush.bf16.msra.mxu0 %v67
    %85 = vmatpush.bf16.msra.mxu0 %v66
    %86 = vmatmul.bf16.gmra.mxu0 %v76
    %v87 = vpop.f32.mrf.mxu0
    %v88 = vadd.f32 %v43, %v87
    %v89 = vpop.f32.mrf.mxu0
    %v90 = vadd.f32 %v43, %v89
    %91 = vdwg.mxu0
    %v92 = vmul.f32 %v88, 0.5
    %v93 = vmul.f32 %v90, 0.5
    %v94 = vmul.f32 %v88, 0.044715
    %v95 = vmul.f32 %v90, 0.044715
    %v96 = vmul.f32 %v94, %v88
    %v97 = vmul.f32 %v95, %v90
    %v98 = vmul.f32 %v96, %v88
    %v99 = vmul.f32 %v97, %v90
    %v100 = vadd.f32 %v88, %v98
    %v101 = vadd.f32 %v90, %v99
    %v102 = vmul.f32 %v100, 0.7978846
    %v103 = vmul.f32 %v101, 0.7978846
    %v104 = vtanh.pop %v102
    %v105 = vtanh.pop %v103
    %v106 = vadd.f32 %v104, 1.0
    %v107 = vadd.f32 %v105, 1.0
    %v108 = vmul.f32 %v92, %v106
    %v109 = vmul.f32 %v93, %v107
    %v110 = vpack.c.bf16 %v108, %v108
    %v111 = vpack.c.bf16 %v109, %v109
    %112 = vst [vmem:[%s3] sm:$0xf] %v110
    %113 = vst [vmem:[%s3 + $0x4] sm:$0xf] %v111
    // Predicated region
    $region18: #{distilbert_classifier_forward.21} parent=1 // pred_check
      _
    $region19: #{distilbert_classifier_forward.21} parent=1 // pred_check_branch
      %115 = sbr.rel (0) target = $region21
    $region20: #{distilbert_classifier_forward.21} parent=1 // pred_region
      _
    $region21: #{distilbert_classifier_forward.21} parent=1 // pred_fallthru
      _
    // Predicated region
    $region22: #{distilbert_classifier_forward.21} parent=1 // pred_check
      _
    $region23: #{distilbert_classifier_forward.21} parent=1 // pred_check_branch
      %117 = sbr.rel (0) target = $region25
    $region24: #{distilbert_classifier_forward.21} parent=1 // pred_region
      _
    $region25: #{distilbert_classifier_forward.21} parent=1 // pred_fallthru
      _
    %118 = vsyncpa [#allocation3], 1

// kernel: distilbert_classifier_forward.17
$region0: #{distilbert_classifier_forward.17}
  #allocation0 [shape = 'u32[]', space=smem, size = 0x4, offset = 0x4, fixed_abs, tag = 'smem constant byte address 0x4 - core index']
  #allocation1 [shape = 'u32[72,128]{1,0:T(1,128)}', space=vmem, size = 0x9000, scoped, tag = 'internal scratch']
  %s0 = inlined_call_operand.vmem [shape: bf16[16,128], index: 0, kind: input, shape index: {}]
  %s1 = inlined_call_operand.vmem [shape: bf16[128,64], index: 1, kind: input, shape index: {}]
  %s2 = inlined_call_operand.vmem [shape: f32[1,64], index: 2, kind: input, shape index: {}]
  %s3 = inlined_call_operand.vmem [shape: bf16[16,64], index: 3, kind: input, shape index: {}]
  %s4 = inlined_call_operand.vmem [shape: f32[1,64], index: 4, kind: input, shape index: {}]
  %s5 = inlined_call_operand.vmem [shape: f32[1,64], index: 5, kind: input, shape index: {}]
  %s6 = inlined_call_operand.vmem [shape: bf16[16,64], index: 6, kind: output, shape index: {}]
  %s7 = sld [smem:[#allocation0]]
  $region34: #{distilbert_classifier_forward.17} parent=0
    _
  %s9 = ssub.s32 1, %s7
  %s10 = scalar_select 0, %s9, %s7
  // Predicated region
  $region2: #{distilbert_classifier_forward.17} parent=0 // pred_check
    _
  $region3: #{distilbert_classifier_forward.17} parent=0 // pred_check_branch
    %12 = sbr.rel (0) target = $region5
  $region4: #{distilbert_classifier_forward.17} parent=0 // pred_region
    _
  $region5: #{distilbert_classifier_forward.17} parent=0 // pred_fallthru
    _
  // Predicated region
  $region6: #{distilbert_classifier_forward.17} parent=0 // pred_check
    _
  $region7: #{distilbert_classifier_forward.17} parent=0 // pred_check_branch
    %14 = sbr.rel (0) target = $region9
  $region8: #{distilbert_classifier_forward.17} parent=0 // pred_region
    _
  $region9: #{distilbert_classifier_forward.17} parent=0 // pred_fallthru
    _
  // Predicated region
  $region10: #{distilbert_classifier_forward.17} parent=0 // pred_check
    _
  $region11: #{distilbert_classifier_forward.17} parent=0 // pred_check_branch
    %16 = sbr.rel (0) target = $region13
  $region12: #{distilbert_classifier_forward.17} parent=0 // pred_region
    _
  $region13: #{distilbert_classifier_forward.17} parent=0 // pred_fallthru
    _
  // Predicated region
  $region14: #{distilbert_classifier_forward.17} parent=0 // pred_check
    _
  $region15: #{distilbert_classifier_forward.17} parent=0 // pred_check_branch
    %18 = sbr.rel (0) target = $region17
  $region16: #{distilbert_classifier_forward.17} parent=0 // pred_region
    _
  $region17: #{distilbert_classifier_forward.17} parent=0 // pred_fallthru
    _
  // Predicated region
  $region18: #{distilbert_classifier_forward.17} parent=0 // pred_check
    _
  $region19: #{distilbert_classifier_forward.17} parent=0 // pred_check_branch
    %20 = sbr.rel (0) target = $region21
  $region20: #{distilbert_classifier_forward.17} parent=0 // pred_region
    _
  $region21: #{distilbert_classifier_forward.17} parent=0 // pred_fallthru
    _
  // Predicated region
  $region22: #{distilbert_classifier_forward.17} parent=0 // pred_check
    _
  $region23: #{distilbert_classifier_forward.17} parent=0 // pred_check_branch
    %22 = sbr.rel (0) target = $region25
  $region24: #{distilbert_classifier_forward.17} parent=0 // pred_region
    _
  $region25: #{distilbert_classifier_forward.17} parent=0 // pred_fallthru
    _
  %v23 = vld [vmem:[%s0] sm:$0xf]
  %v24 = vld [vmem:[%s0 + $0x4] sm:$0xf]
  %v25 = vld [vmem:[%s1] sm:$0xf]
  %v26 = vld [vmem:[%s1 + $0x4] sm:$0xf]
  %v27 = vld [vmem:[%s1 + $0x8] sm:$0xf]
  %v28 = vld [vmem:[%s1 + $0xc] sm:$0xf]
  %v29 = vld [vmem:[%s1 + $0x10] sm:$0xf]
  %v30 = vld [vmem:[%s1 + $0x14] sm:$0xf]
  %v31 = vld [vmem:[%s1 + $0x18] sm:$0xf]
  %v32 = vld [vmem:[%s1 + $0x1c] sm:$0xf]
  %v33 = vld [vmem:[%s1 + $0x20] sm:$0xf]
  %v34 = vld [vmem:[%s1 + $0x24] sm:$0xf]
  %v35 = vld [vmem:[%s1 + $0x28] sm:$0xf]
  %v36 = vld [vmem:[%s1 + $0x2c] sm:$0xf]
  %v37 = vld [vmem:[%s1 + $0x30] sm:$0xf]
  %v38 = vld [vmem:[%s1 + $0x34] sm:$0xf]
  %v39 = vld [vmem:[%s1 + $0x38] sm:$0xf]
  %v40 = vld [vmem:[%s1 + $0x3c] sm:$0xf]
  %v41 = vld [vmem:[%s2] sm:$0x1]
  %v43 = vperm.slane %v41, 0
  %v47 = vunpack.c.l.b16 %v23
  %v48 = vunpack.c.l.b16 %v24
  %v49 = vpack.c.b16 %v48, %v47
  %v67 = vunpack.c.l.b16 %v25
  %v68 = vunpack.c.l.b16 %v26
  %v69 = vunpack.c.l.b16 %v27
  %v70 = vunpack.c.l.b16 %v28
  %v71 = vunpack.c.l.b16 %v29
  %v72 = vunpack.c.l.b16 %v30
  %v73 = vunpack.c.l.b16 %v31
  %v74 = vunpack.c.l.b16 %v32
  %v75 = vunpack.c.l.b16 %v33
  %v76 = vunpack.c.l.b16 %v34
  %v77 = vunpack.c.l.b16 %v35
  %v78 = vunpack.c.l.b16 %v36
  %v79 = vunpack.c.l.b16 %v37
  %v80 = vunpack.c.l.b16 %v38
  %v81 = vunpack.c.l.b16 %v39
  %v82 = vunpack.c.l.b16 %v40
  %v83 = vpack.c.b16 %v68, %v67
  %v84 = vpack.c.b16 %v70, %v69
  %v85 = vpack.c.b16 %v72, %v71
  %v86 = vpack.c.b16 %v74, %v73
  %v87 = vpack.c.b16 %v76, %v75
  %v88 = vpack.c.b16 %v78, %v77
  %v89 = vpack.c.b16 %v80, %v79
  %v90 = vpack.c.b16 %v82, %v81
  %99 = vmatpush.bf16.msra.mxu0 %v90
  %100 = vmatpush.bf16.msra.mxu0 %v89
  %101 = vmatpush.bf16.msra.mxu0 %v88
  %102 = vmatpush.bf16.msra.mxu0 %v87
  %103 = vmatpush.bf16.msra.mxu0 %v86
  %104 = vmatpush.bf16.msra.mxu0 %v85
  %105 = vmatpush.bf16.msra.mxu0 %v84
  %106 = vmatpush.bf16.msra.mxu0 %v83
  %107 = vmatmul.bf16.gmra.mxu0 %v49
  %v108 = vpop.f32.mrf.mxu0
  %v109 = vadd.f32 %v43, %v108
  %v110 = vpop.f32.mrf.mxu0
  %v111 = vadd.f32 %v43, %v110
  %112 = vdwg.mxu0
  %v113 = vld [vmem:[%s3] sm:$0xf]
  %v114 = vld [vmem:[%s3 + $0x4] sm:$0xf]
  %v115 = vunpack.c.l.bf16 %v113
  %v116 = vunpack.c.l.bf16 %v114
  %v117 = vadd.f32 %v109, %v115
  %v118 = vadd.f32 %v111, %v116
  %vm119 = vcmask 523264
  %v120 = vsel %vm119, %v117, 0.0
  %121 = vadd.xlane.f32.xlu0 %v120
  %v122 = vpop.xlane.xlu0 %121
  %v123 = vsel %vm119, %v118, 0.0
  %124 = vadd.xlane.f32.xlu0 %v123
  %v125 = vpop.xlane.xlu0 %124
  %v126 = vrcp.pop 64.0
  %v127 = vmul.f32 64.0, %v126
  %v128 = vsub.f32 1.0, %v127
  %v129 = vmul.f32 %v126, %v128
  %v130 = vadd.f32 %v126, %v129
  %vm131 = vweird.f32 %v126
  %v132 = vsel %vm131, %v126, %v130
  %v133 = vmul.f32 %v122, %v132
  %v134 = vmul.f32 %v125, %v132
  %v135 = vsub.f32 %v117, %v133
  %v136 = vsub.f32 %v118, %v134
  %v137 = vmul.f32 %v135, %v135
  %v138 = vmul.f32 %v136, %v136
  %v139 = vsel %vm119, %v137, 0.0
  %140 = vadd.xlane.f32.xlu0 %v139
  %v141 = vpop.xlane.xlu0 %140
  %v142 = vsel %vm119, %v138, 0.0
  %143 = vadd.xlane.f32.xlu0 %v142
  %v144 = vpop.xlane.xlu0 %143
  %v145 = vmul.f32 %v141, %v132
  %v146 = vmul.f32 %v144, %v132
  %v147 = vadd.f32 %v145, 1e-12
  %v148 = vadd.f32 %v146, 1e-12
  %v149 = vrsqrt.pop %v147
  %v150 = vmul.f32 %v149, %v147
  %v151 = vmul.f32 %v150, %v149
  %v152 = vmul.f32 0.5, %v151
  %v153 = vsub.f32 1.5, %v152
  %v154 = vmul.f32 %v149, %v153
  %vm155 = vweird.f32 %v147
  %vm156 = vweird.f32 %v149
  %vm157 = vmor %vm155, %vm156
  %v158 = vsel %vm157, %v149, %v154
  %v159 = vrsqrt.pop %v148
  %v160 = vmul.f32 %v159, %v148
  %v161 = vmul.f32 %v160, %v159
  %v162 = vmul.f32 0.5, %v161
  %v163 = vsub.f32 1.5, %v162
  %v164 = vmul.f32 %v159, %v163
  %vm165 = vweird.f32 %v148
  %vm166 = vweird.f32 %v159
  %vm167 = vmor %vm165, %vm166
  %v168 = vsel %vm167, %v159, %v164
  %v169 = vmul.f32 %v135, %v158
  %v170 = vmul.f32 %v136, %v168
  %v171 = vld [vmem:[%s4] sm:$0x1]
  %v173 = vperm.slane %v171, 0
  %v175 = vmul.f32 %v169, %v173
  %v176 = vmul.f32 %v170, %v173
  %v177 = vld [vmem:[%s5] sm:$0x1]
  %v179 = vperm.slane %v177, 0
  %v181 = vadd.f32 %v175, %v179
  %v182 = vadd.f32 %v176, %v179
  %v183 = vpack.c.bf16 %v181, %v181
  %v184 = vpack.c.bf16 %v182, %v182
  %vm185 = vcmask 519168
  %186 = vst.msk [vmem:[%s6] sm:$0xf] %vm185, %v183
  %187 = vst.msk [vmem:[%s6 + $0x4] sm:$0xf] %vm185, %v184
  // Predicated region
  $region26: #{distilbert_classifier_forward.17} parent=0 // pred_check
    _
  $region27: #{distilbert_classifier_forward.17} parent=0 // pred_check_branch
    %189 = sbr.rel (0) target = $region29
  $region28: #{distilbert_classifier_forward.17} parent=0 // pred_region
    _
  $region29: #{distilbert_classifier_forward.17} parent=0 // pred_fallthru
    _
  // Predicated region
  $region30: #{distilbert_classifier_forward.17} parent=0 // pred_check
    _
  $region31: #{distilbert_classifier_forward.17} parent=0 // pred_check_branch
    %191 = sbr.rel (0) target = $region33
  $region32: #{distilbert_classifier_forward.17} parent=0 // pred_region
    _
  $region33: #{distilbert_classifier_forward.17} parent=0 // pred_fallthru
    _

// kernel: distilbert_classifier_forward.23
$region0: #{distilbert_classifier_forward.23}
  #allocation0 [shape = 'u32[]', space=smem, size = 0x4, offset = 0x4, fixed_abs, tag = 'smem constant byte address 0x4 - core index']
  #allocation1 [shape = 'u32[72,128]{1,0:T(1,128)}', space=vmem, size = 0x9000, scoped, tag = 'internal scratch']
  %s0 = inlined_call_operand.vmem [shape: bf16[2,64], index: 0, kind: input, shape index: {}]
  %s1 = inlined_call_operand.vmem [shape: bf16[64,128], index: 1, kind: input, shape index: {}]
  %s2 = inlined_call_operand.vmem [shape: f32[1,128], index: 2, kind: input, shape index: {}]
  %s3 = inlined_call_operand.hbm [shape: f32[2,128], index: 3, kind: output, shape index: {}]
  %s4 = sld [smem:[#allocation0]]
  $region22: #{distilbert_classifier_forward.23} parent=0
    _
  %s6 = ssub.s32 1, %s4
  %s7 = scalar_select 0, %s6, %s4
  $region1: #{distilbert_classifier_forward.23} parent=0
    #allocation2 [shape = 'u8[1024]{0}', space=vmem, size = 0x400, scoped, tag = 'output window, operand 0, single buffered']
    #allocation3 [shape = 's32[1]{0}', space=sflag, size = 0x4, scoped, tag = 'scoped memory for distilbert_classifier_forward.23']
    %8 = vsyncpa [#allocation3], 0
    // Predicated region
    $region2: #{distilbert_classifier_forward.23} parent=1 // pred_check
      _
    $region3: #{distilbert_classifier_forward.23} parent=1 // pred_check_branch
      %10 = sbr.rel (0) target = $region5
    $region4: #{distilbert_classifier_forward.23} parent=1 // pred_region
      _
    $region5: #{distilbert_classifier_forward.23} parent=1 // pred_fallthru
      _
    // Predicated region
    $region6: #{distilbert_classifier_forward.23} parent=1 // pred_check
      _
    $region7: #{distilbert_classifier_forward.23} parent=1 // pred_check_branch
      %12 = sbr.rel (0) target = $region9
    $region8: #{distilbert_classifier_forward.23} parent=1 // pred_region
      _
    $region9: #{distilbert_classifier_forward.23} parent=1 // pred_fallthru
      _
    // Predicated region
    $region10: #{distilbert_classifier_forward.23} parent=1 // pred_check
      _
    $region11: #{distilbert_classifier_forward.23} parent=1 // pred_check_branch
      %14 = sbr.rel (0) target = $region13
    $region12: #{distilbert_classifier_forward.23} parent=1 // pred_region
      _
    $region13: #{distilbert_classifier_forward.23} parent=1 // pred_fallthru
      _
    %v16 = vld [vmem:[%s0] sm:$0x1]
    %v17 = vld [vmem:[%s1] sm:$0xf]
    %v18 = vld [vmem:[%s1 + $0x4] sm:$0xf]
    %v19 = vld [vmem:[%s1 + $0x8] sm:$0xf]
    %v20 = vld [vmem:[%s1 + $0xc] sm:$0xf]
    %v21 = vld [vmem:[%s1 + $0x10] sm:$0xf]
    %v22 = vld [vmem:[%s1 + $0x14] sm:$0xf]
    %v23 = vld [vmem:[%s1 + $0x18] sm:$0xf]
    %v24 = vld [vmem:[%s1 + $0x1c] sm:$0xf]
    %v25 = vld [vmem:[%s2] sm:$0x1]
    %v27 = vperm.slane %v25, 0
    %v37 = vunpack.c.l.b16 %v17
    %v38 = vunpack.c.l.b16 %v18
    %v39 = vunpack.c.l.b16 %v19
    %v40 = vunpack.c.l.b16 %v20
    %v41 = vunpack.c.l.b16 %v21
    %v42 = vunpack.c.l.b16 %v22
    %v43 = vunpack.c.l.b16 %v23
    %v44 = vunpack.c.l.b16 %v24
    %v45 = vpack.c.b16 %v38, %v37
    %v46 = vpack.c.b16 %v40, %v39
    %v47 = vpack.c.b16 %v42, %v41
    %v48 = vpack.c.b16 %v44, %v43
    %vm53 = vcmask 523264
    %v55 = vsel %vm53, %v16, 0
    %57 = vmatpush.bf16.msra.mxu0 0
    %58 = vmatpush.bf16.msra.mxu0 0
    %59 = vmatpush.bf16.msra.mxu0 0
    %60 = vmatpush.bf16.msra.mxu0 0
    %61 = vmatpush.bf16.msra.mxu0 %v48
    %62 = vmatpush.bf16.msra.mxu0 %v47
    %63 = vmatpush.bf16.msra.mxu0 %v46
    %64 = vmatpush.bf16.msra.mxu0 %v45
    %65 = vmatmul.bf16.gmra.mxu0 %v55
    %v66 = vpop.f32.mrf.mxu0
    %v67 = vadd.f32 %v27, %v66
    %v68 = vpop.f32.mrf.mxu0
    %69 = vdwg.mxu0
    %70 = vst [vmem:[#allocation2] sm:$0x3] %v67
    // Predicated region
    $region14: #{distilbert_classifier_forward.23} parent=1 // pred_check
      _
    $region15: #{distilbert_classifier_forward.23} parent=1 // pred_check_branch
      %72 = sbr.rel (0) target = $region17
    $region16: #{distilbert_classifier_forward.23} parent=1 // pred_region
      %74 = vsyncadd [#allocation3], 0
      %s76 = sshll.u32 [#allocation2], 4
      %s77 = int_to_ptr.vmem [resolvable:$true] %s76
      %s78 = sshll.u32 %s3, 4
      %s79 = int_to_ptr.hbm [resolvable:$true] %s78
      %81 = dma.vmem_to_hbm [thread:$0]  %s77, 32, %s79, [#allocation3]
    $region17: #{distilbert_classifier_forward.23} parent=1 // pred_fallthru
      _
    // Predicated region
    $region18: #{distilbert_classifier_forward.23} parent=1 // pred_check
      _
    $region19: #{distilbert_classifier_forward.23} parent=1 // pred_check_branch
      %83 = sbr.rel (0) target = $region21
    $region20: #{distilbert_classifier_forward.23} parent=1 // pred_region
      %85 = dma.done [#allocation3], 32
    $region21: #{distilbert_classifier_forward.23} parent=1 // pred_fallthru
      _
    %86 = vsyncpa [#allocation3], 1

</llo_original>
